<compile_context>
chip_gen: v6e
topology: v6e:2x2x1
jax: 0.10.0
libtpu: 0.0.40
codegen_flags: <defaults>
</compile_context>

<pallas_src>
import functools

import jax
import jax.numpy as jnp
from jax import lax
from jax.experimental import pallas as pl
from jax.experimental.pallas import tpu as pltpu


def _lstm_layer_kernel(x_ref, wih_ref, whh_ref, b_ref, seq_ref, hn_ref,
                       h_scr, c_scr, gx_scr, *, unroll):
    """One (direction, time-tile) grid step of an LSTM layer.

    x_ref:   (tT*B, I)   VMEM  time-major rows of the current time tile
    wih_ref: (I, 4H)     VMEM  W_ih^T for this direction
    whh_ref: (H, 4H)     VMEM  W_hh^T for this direction
    b_ref:   (1, 4H)     VMEM  b_ih + b_hh (f32) for this direction
    seq_ref: (tT, B, H)  out   hidden states for this tile / direction
    hn_ref:  (B, H)      out   final hidden state for this direction (f32)
    h_scr, c_scr: (B, H) f32 scratch, carried across time tiles
    gx_scr:  (tT*B, 4H)  f32 scratch (hoisted input projection for the tile)
    """
    d = pl.program_id(0)            # direction: 0 = forward, 1 = backward
    k = pl.program_id(1)            # time-tile step (physical tile via index_map)
    n_t = pl.num_programs(1)
    tT, B, H = seq_ref.shape

    @pl.when(k == 0)
    def _init():
        h_scr[...] = jnp.zeros_like(h_scr)
        c_scr[...] = jnp.zeros_like(c_scr)

    # Hoisted input projection: one big MXU matmul per tile, bias folded in once
    # (removes T tiny matmuls and T bias re-broadcasts from the recurrence).
    gx_scr[...] = jnp.dot(x_ref[...], wih_ref[...],
                          preferred_element_type=jnp.float32) + b_ref[...]

    whh = whh_ref[...]              # load once per tile, reused every step

    def step(t, carry):
        # forward walks the tile 0..tT-1, backward walks it tT-1..0
        t_loc = jnp.where(d == 0, t, tT - 1 - t)
        gx_t = gx_scr[pl.ds(t_loc * B, B), :]                    # (B, 4H) f32
        h_prev = h_scr[...]
        c_prev = c_scr[...]
        gates = gx_t + jnp.dot(h_prev.astype(whh.dtype), whh,
                               preferred_element_type=jnp.float32)
        # PyTorch gate order [i, f, g, o].
        # TODO(synk): with H < 128 these gate slices are sub-lane-width; padding
        # H (or 4H to a 256 multiple on v6e/v7x) would make them lane-aligned.
        i = jax.nn.sigmoid(gates[:, 0 * H:1 * H])
        f = jax.nn.sigmoid(gates[:, 1 * H:2 * H])
        g = jnp.tanh(gates[:, 2 * H:3 * H])
        o = jax.nn.sigmoid(gates[:, 3 * H:4 * H])
        c = f * c_prev + i * g
        h = o * jnp.tanh(c)
        c_scr[...] = c
        h_scr[...] = h
        seq_ref[t_loc] = h.astype(seq_ref.dtype)
        return carry

    # Unrolled so independent work (seq store / gx load of step t) co-issues
    # with the recurrent matmul of step t+1.
    lax.fori_loop(0, tT, step, 0, unroll=unroll)

    @pl.when(k == n_t - 1)
    def _finalize():
        hn_ref[...] = h_scr[...].astype(hn_ref.dtype)


def _pick_t_tile(T, B, target=32):
    """Largest tile <= target dividing T with (tile*B) sublane-aligned."""
    for tt in range(min(T, max(target, 1)), 0, -1):
        if T % tt == 0 and (tt * B) % 8 == 0:
            return tt
    return T


def lstm_layer(x_tm, layer_params, *, compute_dtype=jnp.float32, t_tile=None):
    """Run all directions of one LSTM layer in a single pallas_call.

    x_tm: (T, B, I) time-major input.
    layer_params: per-direction tuples (w_ih (4H,I), w_hh (4H,H), b_ih, b_hh).
    Returns (seq (T, B, D*H) in compute_dtype, h_n (B, D*H) float32).
    """
    T, B, I = x_tm.shape
    D = len(layer_params)
    H = layer_params[0][1].shape[1]

    if (t_tile is None or T % t_tile != 0
            or ((t_tile * B) % 8 != 0 and t_tile != T)):
        t_tile = _pick_t_tile(T, B, target=t_tile or 32)
    n_t = T // t_tile

    # Stack per-direction weights, pre-transpose for row-major matmuls, fold
    # the two biases.  Matmul operands cast to compute_dtype (bf16 recommended
    # on all TPU generations); bias / recurrent state stay f32.
    wih_t = jnp.stack([p[0].T for p in layer_params]).astype(compute_dtype)    # (D,I,4H)
    whh_t = jnp.stack([p[1].T for p in layer_params]).astype(compute_dtype)    # (D,H,4H)
    bias = jnp.stack([(p[2] + p[3]).reshape(1, 4 * H)
                      for p in layer_params])                                  # (D,1,4H) f32
    x2d = x_tm.reshape(T * B, I).astype(compute_dtype)                         # time-major rows

    def k_phys(d, k):
        # forward direction gets tiles in order, backward in reverse order
        return k + d * (n_t - 1 - 2 * k)

    x_spec = pl.BlockSpec((t_tile * B, I), lambda d, k: (k_phys(d, k), 0))
    wih_spec = pl.BlockSpec((None, I, 4 * H), lambda d, k: (d, 0, 0))
    whh_spec = pl.BlockSpec((None, H, 4 * H), lambda d, k: (d, 0, 0))
    b_spec = pl.BlockSpec((None, 1, 4 * H), lambda d, k: (d, 0, 0))
    seq_spec = pl.BlockSpec((None, t_tile, B, H),
                            lambda d, k: (d, k_phys(d, k), 0, 0))
    hn_spec = pl.BlockSpec((None, B, H), lambda d, k: (d, 0, 0))

    cd_bytes = jnp.dtype(compute_dtype).itemsize
    est = (2 * t_tile * B * I * cd_bytes                 # x tile (double-buffered)
           + 2 * t_tile * B * H * cd_bytes               # seq tile (double-buffered)
           + 2 * (I + H + 1) * 4 * H * 4                 # weight + bias blocks
           + (2 * B * H + t_tile * B * 4 * H + B * H) * 4)   # scratch + hn
    vmem_limit = int(min(max(4 * est, 8 << 20), 32 << 20))   # safe on v7x 64 MiB

    unroll = True if t_tile <= 8 else 4
    kernel = functools.partial(_lstm_layer_kernel, unroll=unroll)

    seq, hn = pl.pallas_call(
        kernel,
        out_shape=(jax.ShapeDtypeStruct((D, T, B, H), compute_dtype),
                   jax.ShapeDtypeStruct((D, B, H), jnp.float32)),
        grid_spec=pltpu.PrefetchScalarGridSpec(
            num_scalar_prefetch=0,
            grid=(D, n_t),
            in_specs=[x_spec, wih_spec, whh_spec, b_spec],
            out_specs=(seq_spec, hn_spec),
            scratch_shapes=[pltpu.VMEM((B, H), jnp.float32),
                            pltpu.VMEM((B, H), jnp.float32),
                            pltpu.VMEM((t_tile * B, 4 * H), jnp.float32)]),
        compiler_params=pltpu.CompilerParams(
            dimension_semantics=("parallel", "arbitrary"),
            vmem_limit_bytes=vmem_limit),
    )(x2d, wih_t, whh_t, bias)

    if D == 1:
        return seq[0], hn[0]
    # PyTorch layout: features = [forward | backward] along the last dim.
    seq_cat = jnp.transpose(seq, (1, 2, 0, 3)).reshape(T, B, D * H)
    hn_cat = jnp.transpose(hn, (1, 0, 2)).reshape(B, D * H)
    return seq_cat, hn_cat


def init_lstm_params(key, input_size, hidden_size, num_layers, bidirectional):
    """Deterministic params matching nn.LSTM shapes (uniform(-1/sqrt(H), 1/sqrt(H)))."""
    num_directions = 2 if bidirectional else 1
    bound = 1.0 / float(hidden_size) ** 0.5
    params = []
    for layer in range(num_layers):
        layer_in = input_size if layer == 0 else hidden_size * num_directions
        dirs = []
        for _ in range(num_directions):
            key, k1, k2, k3, k4 = jax.random.split(key, 5)
            w_ih = jax.random.uniform(k1, (4 * hidden_size, layer_in),
                                      jnp.float32, -bound, bound)
            w_hh = jax.random.uniform(k2, (4 * hidden_size, hidden_size),
                                      jnp.float32, -bound, bound)
            b_ih = jax.random.uniform(k3, (4 * hidden_size,),
                                      jnp.float32, -bound, bound)
            b_hh = jax.random.uniform(k4, (4 * hidden_size,),
                                      jnp.float32, -bound, bound)
            dirs.append((w_ih, w_hh, b_ih, b_hh))
        params.append(dirs)
    return params


def lstm_encoder_forward(x, lengths, params, bidirectional, *,
                         compute_dtype=jnp.float32, t_tile=None):
    """x: (B, T, I) batch-first; lengths: (B,) ints (accepted but unused, as in the reference)."""
    # NOTE: the PyTorch forward builds `packed` from lengths but then calls
    # self.lstm(x) on the padded input, so lengths never affect the output.
    del lengths
    del bidirectional  # implied by the params structure
    x_tm = jnp.transpose(x, (1, 0, 2))          # (T, B, I) time-major
    inp = x_tm
    hn = None
    for layer_params in params:
        seq, hn = lstm_layer(inp, layer_params, compute_dtype=compute_dtype,
                             t_tile=t_tile)
        inp = seq
        # TODO(synk): train-mode inter-layer dropout (p=0.5) not modeled; this
        # is the eval() forward where dropout is identity.
    return hn.astype(jnp.float32)               # (B, D*H)


# ---------------------- pure-JAX reference for validation ----------------------
def _ref_layer(x_tm, w_ih, w_hh, b_ih, b_hh):
    B = x_tm.shape[1]
    H = w_hh.shape[1]

    def step(carry, x_t):
        h, c = carry
        gates = x_t @ w_ih.T + h @ w_hh.T + b_ih + b_hh
        i, f, g, o = jnp.split(gates, 4, axis=-1)
        i, f, o = jax.nn.sigmoid(i), jax.nn.sigmoid(f), jax.nn.sigmoid(o)
        g = jnp.tanh(g)
        c = f * c + i * g
        h = o * jnp.tanh(c)
        return (h, c), h

    (h, _), seq = lax.scan(step, (jnp.zeros((B, H), jnp.float32),
                                  jnp.zeros((B, H), jnp.float32)), x_tm)
    return seq, h


def ref_forward(x, params, bidirectional):
    x_tm = jnp.transpose(x, (1, 0, 2))
    inp = x_tm
    hn_f = hn_b = None
    for layer_params in params:
        seq_f, hn_f = _ref_layer(inp, *layer_params[0])
        if bidirectional:
            seq_b, hn_b = _ref_layer(jnp.flip(inp, axis=0), *layer_params[1])
            seq_b = jnp.flip(seq_b, axis=0)
            inp = jnp.concatenate([seq_f, seq_b], axis=-1)
        else:
            inp = seq_f
    if bidirectional:
        return jnp.concatenate([hn_f, hn_b], axis=-1)
    return hn_f


if __name__ == "__main__":
    # Small shapes implied by the module: x (batch, seq, input_size)
    B, T, I, H = 2, 8, 16, 32
    NUM_LAYERS = 2
    BIDIRECTIONAL = True

    key = jax.random.PRNGKey(0)
    kx, kp = jax.random.split(key)
    x = jax.random.normal(kx, (B, T, I), dtype=jnp.float32)
    lengths = jnp.array([T, T - 3], dtype=jnp.int32)   # mirrors signature; unused

    params = init_lstm_params(kp, I, H, NUM_LAYERS, BIDIRECTIONAL)

    h_ref = jax.block_until_ready(ref_forward(x, params, BIDIRECTIONAL))

    # f32-matmul path (t_tile=4 exercises cross-tile h/c carry + reversed tiles).
    h_f32 = jax.block_until_ready(
        lstm_encoder_forward(x, lengths, params, BIDIRECTIONAL,
                             compute_dtype=jnp.float32, t_tile=4))
    assert h_f32.shape == (B, 2 * H if BIDIRECTIONAL else H), h_f32.shape
    assert jnp.allclose(h_f32, h_ref, atol=5e-4, rtol=5e-4), (
        float(jnp.max(jnp.abs(h_f32 - h_ref))))

    # bf16-matmul path (MXU-native on v5e/v6e/v7x); f32 recurrent state & cell.
    h_bf16 = jax.block_until_ready(
        lstm_encoder_forward(x, lengths, params, BIDIRECTIONAL,
                             compute_dtype=jnp.bfloat16, t_tile=4))
    assert jnp.allclose(h_bf16, h_ref, atol=5e-2, rtol=5e-2), (
        float(jnp.max(jnp.abs(h_bf16 - h_ref))))

    print("KERNEL_OK")
</pallas_src>

<mosaic_0001>
module attributes {stable_mosaic.version = 11 : i64} {
  func.func @_lstm_layer_kernel(%arg0: i32, %arg1: i32, %arg2: memref<8x16xf32, #tpu.memory_space<vmem>>, %arg3: memref<1x16x128xf32, #tpu.memory_space<vmem>>, %arg4: memref<1x32x128xf32, #tpu.memory_space<vmem>>, %arg5: memref<1x1x128xf32, #tpu.memory_space<vmem>>, %arg6: memref<1x4x2x32xf32, #tpu.memory_space<vmem>>, %arg7: memref<1x2x32xf32, #tpu.memory_space<vmem>>, %arg8: memref<2x32xf32, #tpu.memory_space<vmem>>, %arg9: memref<2x32xf32, #tpu.memory_space<vmem>>, %arg10: memref<8x128xf32, #tpu.memory_space<vmem>>) attributes {dimension_semantics = [#tpu.dimension_semantics<parallel>, #tpu.dimension_semantics<arbitrary>], iteration_bounds = array<i64: 2, 2>, scalar_prefetch = 0 : i64, scratch_operands = 3 : i64, tpu.core_type = #tpu.core_type<tc>, window_params = [{transform_indices = @transform_0, window_bounds = array<i64: 8, 16>}, {transform_indices = @transform_1, window_bounds = array<i64: 1, 16, 128>}, {transform_indices = @transform_2, window_bounds = array<i64: 1, 32, 128>}, {transform_indices = @transform_3, window_bounds = array<i64: 1, 1, 128>}, {transform_indices = @transform_4, window_bounds = array<i64: 1, 4, 2, 32>}, {transform_indices = @transform_5, window_bounds = array<i64: 1, 2, 32>}]} {
    %c0_i32 = arith.constant 0 : i32
    %0 = arith.cmpi eq, %arg1, %c0_i32 : i32
    %1 = arith.extui %0 : i1 to i32
    %c0_i32_0 = arith.constant 0 : i32
    %2 = arith.cmpi ne, %1, %c0_i32_0 : i32
    scf.if %2 {
      %cst_92 = arith.constant 0.000000e+00 : f32
      %181 = vector.broadcast %cst_92 : f32 to vector<2x32xf32>
      %c0_93 = arith.constant 0 : index
      %c0_94 = arith.constant 0 : index
      %182 = vector.load %arg8[%c0_93, %c0_94] : memref<2x32xf32, #tpu.memory_space<vmem>>, vector<2x32xf32>
      tpu.vector_store %arg8[%c0_93, %c0_94], %181 {strides = array<i32>} : memref<2x32xf32, #tpu.memory_space<vmem>>, vector<2x32xf32>,
      %cst_95 = arith.constant 0.000000e+00 : f32
      %183 = vector.broadcast %cst_95 : f32 to vector<2x32xf32>
      %c0_96 = arith.constant 0 : index
      %c0_97 = arith.constant 0 : index
      %184 = vector.load %arg9[%c0_96, %c0_97] : memref<2x32xf32, #tpu.memory_space<vmem>>, vector<2x32xf32>
      tpu.vector_store %arg9[%c0_96, %c0_97], %183 {strides = array<i32>} : memref<2x32xf32, #tpu.memory_space<vmem>>, vector<2x32xf32>,
    } else {
    }
    %c0 = arith.constant 0 : index
    %c0_1 = arith.constant 0 : index
    %3 = vector.load %arg2[%c0, %c0_1] : memref<8x16xf32, #tpu.memory_space<vmem>>, vector<8x16xf32>
    %c0_2 = arith.constant 0 : index
    %c0_3 = arith.constant 0 : index
    %c0_4 = arith.constant 0 : index
    %4 = vector.load %arg3[%c0_2, %c0_3, %c0_4] : memref<1x16x128xf32, #tpu.memory_space<vmem>>, vector<1x16x128xf32>
    %5 = vector.shape_cast %4 : vector<1x16x128xf32> to vector<16x128xf32>
    %cst = arith.constant dense<0.000000e+00> : vector<8x128xf32>
    %6 = tpu.matmul %3, %5, %cst {dimension_numbers = #tpu.dot_dimension_numbers<[1], [0], [0], [1], [0, 0, 1, 1], [], []>} : vector<8x16xf32>, vector<16x128xf32>, vector<8x128xf32> -> vector<8x128xf32>
    %c0_5 = arith.constant 0 : index
    %c0_6 = arith.constant 0 : index
    %c0_7 = arith.constant 0 : index
    %7 = vector.load %arg5[%c0_5, %c0_6, %c0_7] : memref<1x1x128xf32, #tpu.memory_space<vmem>>, vector<1x1x128xf32>
    %8 = vector.shape_cast %7 : vector<1x1x128xf32> to vector<1x128xf32>
    %9 = vector.broadcast %8 : vector<1x128xf32> to vector<8x128xf32>
    %10 = arith.addf %6, %9 : vector<8x128xf32>
    %c0_8 = arith.constant 0 : index
    %c0_9 = arith.constant 0 : index
    %11 = vector.load %arg10[%c0_8, %c0_9] : memref<8x128xf32, #tpu.memory_space<vmem>>, vector<8x128xf32>
    tpu.vector_store %arg10[%c0_8, %c0_9], %10 {strides = array<i32>} : memref<8x128xf32, #tpu.memory_space<vmem>>, vector<8x128xf32>,
    %c0_10 = arith.constant 0 : index
    %c0_11 = arith.constant 0 : index
    %c0_12 = arith.constant 0 : index
    %12 = vector.load %arg4[%c0_10, %c0_11, %c0_12] : memref<1x32x128xf32, #tpu.memory_space<vmem>>, vector<1x32x128xf32>
    %13 = vector.shape_cast %12 : vector<1x32x128xf32> to vector<32x128xf32>
    %c0_i32_13 = arith.constant 0 : i32
    %c0_i32_14 = arith.constant 0 : i32
    %14 = arith.cmpi eq, %arg0, %c0_i32_14 : i32
    %c3_i32 = arith.constant 3 : i32
    %15 = arith.subi %c3_i32, %c0_i32_13 : i32
    %16 = arith.select %14, %c0_i32_13, %15 : i32
    %c2_i32 = arith.constant 2 : i32
    %17 = arith.muli %16, %c2_i32 : i32
    %18 = arith.index_cast %17 : i32 to index
    %c0_15 = arith.constant 0 : index
    %19 = vector.load %arg10[%18, %c0_15] : memref<8x128xf32, #tpu.memory_space<vmem>>, vector<2x128xf32>
    %c0_16 = arith.constant 0 : index
    %c0_17 = arith.constant 0 : index
    %20 = vector.load %arg8[%c0_16, %c0_17] : memref<2x32xf32, #tpu.memory_space<vmem>>, vector<2x32xf32>
    %c0_18 = arith.constant 0 : index
    %c0_19 = arith.constant 0 : index
    %21 = vector.load %arg9[%c0_18, %c0_19] : memref<2x32xf32, #tpu.memory_space<vmem>>, vector<2x32xf32>
    %cst_20 = arith.constant dense<0.000000e+00> : vector<2x128xf32>
    %22 = tpu.matmul %20, %13, %cst_20 {dimension_numbers = #tpu.dot_dimension_numbers<[1], [0], [0], [1], [0, 0, 1, 1], [], []>} : vector<2x32xf32>, vector<32x128xf32>, vector<2x128xf32> -> vector<2x128xf32>
    %23 = arith.addf %19, %22 : vector<2x128xf32>
    %24 = vector.extract_strided_slice %23 {offsets = [0, 0], sizes = [2, 32], strides = [1, 1]} : vector<2x128xf32> to vector<2x32xf32>
    %25 = arith.negf %24 : vector<2x32xf32>
    %26 = math.exp %25 : vector<2x32xf32>
    %cst_21 = arith.constant 1.000000e+00 : f32
    %27 = vector.broadcast %cst_21 : f32 to vector<2x32xf32>
    %28 = arith.addf %27, %26 : vector<2x32xf32>
    %29 = arith.divf %27, %28 : vector<2x32xf32>
    %30 = vector.extract_strided_slice %23 {offsets = [0, 32], sizes = [2, 32], strides = [1, 1]} : vector<2x128xf32> to vector<2x32xf32>
    %31 = arith.negf %30 : vector<2x32xf32>
    %32 = math.exp %31 : vector<2x32xf32>
    %cst_22 = arith.constant 1.000000e+00 : f32
    %33 = vector.broadcast %cst_22 : f32 to vector<2x32xf32>
    %34 = arith.addf %33, %32 : vector<2x32xf32>
    %35 = arith.divf %33, %34 : vector<2x32xf32>
    %36 = vector.extract_strided_slice %23 {offsets = [0, 64], sizes = [2, 32], strides = [1, 1]} : vector<2x128xf32> to vector<2x32xf32>
    %37 = math.tanh %36 : vector<2x32xf32>
    %38 = vector.extract_strided_slice %23 {offsets = [0, 96], sizes = [2, 32], strides = [1, 1]} : vector<2x128xf32> to vector<2x32xf32>
    %39 = arith.negf %38 : vector<2x32xf32>
    %40 = math.exp %39 : vector<2x32xf32>
    %cst_23 = arith.constant 1.000000e+00 : f32
    %41 = vector.broadcast %cst_23 : f32 to vector<2x32xf32>
    %42 = arith.addf %41, %40 : vector<2x32xf32>
    %43 = arith.divf %41, %42 : vector<2x32xf32>
    %44 = arith.mulf %35, %21 : vector<2x32xf32>
    %45 = arith.mulf %29, %37 : vector<2x32xf32>
    %46 = arith.addf %44, %45 : vector<2x32xf32>
    %47 = math.tanh %46 : vector<2x32xf32>
    %48 = arith.mulf %43, %47 : vector<2x32xf32>
    %c0_24 = arith.constant 0 : index
    %c0_25 = arith.constant 0 : index
    %49 = vector.load %arg9[%c0_24, %c0_25] : memref<2x32xf32, #tpu.memory_space<vmem>>, vector<2x32xf32>
    tpu.vector_store %arg9[%c0_24, %c0_25], %46 {strides = array<i32>} : memref<2x32xf32, #tpu.memory_space<vmem>>, vector<2x32xf32>,
    %c0_26 = arith.constant 0 : index
    %c0_27 = arith.constant 0 : index
    %50 = vector.load %arg8[%c0_26, %c0_27] : memref<2x32xf32, #tpu.memory_space<vmem>>, vector<2x32xf32>
    tpu.vector_store %arg8[%c0_26, %c0_27], %48 {strides = array<i32>} : memref<2x32xf32, #tpu.memory_space<vmem>>, vector<2x32xf32>,
    %c0_28 = arith.constant 0 : index
    %51 = arith.index_cast %16 : i32 to index
    %c0_29 = arith.constant 0 : index
    %c0_30 = arith.constant 0 : index
    %52 = vector.load %arg6[%c0_28, %51, %c0_29, %c0_30] : memref<1x4x2x32xf32, #tpu.memory_space<vmem>>, vector<1x1x2x32xf32>
    %53 = vector.shape_cast %52 : vector<1x1x2x32xf32> to vector<2x32xf32>
    %54 = vector.shape_cast %48 : vector<2x32xf32> to vector<1x1x2x32xf32>
    tpu.vector_store %arg6[%c0_28, %51, %c0_29, %c0_30], %54 {strides = array<i32>} : memref<1x4x2x32xf32, #tpu.memory_space<vmem>>, vector<1x1x2x32xf32>,
    %c1_i32 = arith.constant 1 : i32
    %c0_i32_31 = arith.constant 0 : i32
    %55 = arith.cmpi eq, %arg0, %c0_i32_31 : i32
    %c3_i32_32 = arith.constant 3 : i32
    %56 = arith.subi %c3_i32_32, %c1_i32 : i32
    %57 = arith.select %55, %c1_i32, %56 : i32
    %c2_i32_33 = arith.constant 2 : i32
    %58 = arith.muli %57, %c2_i32_33 : i32
    %59 = arith.index_cast %58 : i32 to index
    %c0_34 = arith.constant 0 : index
    %60 = vector.load %arg10[%59, %c0_34] : memref<8x128xf32, #tpu.memory_space<vmem>>, vector<2x128xf32>
    %c0_35 = arith.constant 0 : index
    %c0_36 = arith.constant 0 : index
    %61 = vector.load %arg8[%c0_35, %c0_36] : memref<2x32xf32, #tpu.memory_space<vmem>>, vector<2x32xf32>
    %c0_37 = arith.constant 0 : index
    %c0_38 = arith.constant 0 : index
    %62 = vector.load %arg9[%c0_37, %c0_38] : memref<2x32xf32, #tpu.memory_space<vmem>>, vector<2x32xf32>
    %cst_39 = arith.constant dense<0.000000e+00> : vector<2x128xf32>
    %63 = tpu.matmul %61, %13, %cst_39 {dimension_numbers = #tpu.dot_dimension_numbers<[1], [0], [0], [1], [0, 0, 1, 1], [], []>} : vector<2x32xf32>, vector<32x128xf32>, vector<2x128xf32> -> vector<2x128xf32>
    %64 = arith.addf %60, %63 : vector<2x128xf32>
    %65 = vector.extract_strided_slice %64 {offsets = [0, 0], sizes = [2, 32], strides = [1, 1]} : vector<2x128xf32> to vector<2x32xf32>
    %66 = arith.negf %65 : vector<2x32xf32>
    %67 = math.exp %66 : vector<2x32xf32>
    %cst_40 = arith.constant 1.000000e+00 : f32
    %68 = vector.broadcast %cst_40 : f32 to vector<2x32xf32>
    %69 = arith.addf %68, %67 : vector<2x32xf32>
    %70 = arith.divf %68, %69 : vector<2x32xf32>
    %71 = vector.extract_strided_slice %64 {offsets = [0, 32], sizes = [2, 32], strides = [1, 1]} : vector<2x128xf32> to vector<2x32xf32>
    %72 = arith.negf %71 : vector<2x32xf32>
    %73 = math.exp %72 : vector<2x32xf32>
    %cst_41 = arith.constant 1.000000e+00 : f32
    %74 = vector.broadcast %cst_41 : f32 to vector<2x32xf32>
    %75 = arith.addf %74, %73 : vector<2x32xf32>
    %76 = arith.divf %74, %75 : vector<2x32xf32>
    %77 = vector.extract_strided_slice %64 {offsets = [0, 64], sizes = [2, 32], strides = [1, 1]} : vector<2x128xf32> to vector<2x32xf32>
    %78 = math.tanh %77 : vector<2x32xf32>
    %79 = vector.extract_strided_slice %64 {offsets = [0, 96], sizes = [2, 32], strides = [1, 1]} : vector<2x128xf32> to vector<2x32xf32>
    %80 = arith.negf %79 : vector<2x32xf32>
    %81 = math.exp %80 : vector<2x32xf32>
    %cst_42 = arith.constant 1.000000e+00 : f32
    %82 = vector.broadcast %cst_42 : f32 to vector<2x32xf32>
    %83 = arith.addf %82, %81 : vector<2x32xf32>
    %84 = arith.divf %82, %83 : vector<2x32xf32>
    %85 = arith.mulf %76, %62 : vector<2x32xf32>
    %86 = arith.mulf %70, %78 : vector<2x32xf32>
    %87 = arith.addf %85, %86 : vector<2x32xf32>
    %88 = math.tanh %87 : vector<2x32xf32>
    %89 = arith.mulf %84, %88 : vector<2x32xf32>
    %c0_43 = arith.constant 0 : index
    %c0_44 = arith.constant 0 : index
    %90 = vector.load %arg9[%c0_43, %c0_44] : memref<2x32xf32, #tpu.memory_space<vmem>>, vector<2x32xf32>
    tpu.vector_store %arg9[%c0_43, %c0_44], %87 {strides = array<i32>} : memref<2x32xf32, #tpu.memory_space<vmem>>, vector<2x32xf32>,
    %c0_45 = arith.constant 0 : index
    %c0_46 = arith.constant 0 : index
    %91 = vector.load %arg8[%c0_45, %c0_46] : memref<2x32xf32, #tpu.memory_space<vmem>>, vector<2x32xf32>
    tpu.vector_store %arg8[%c0_45, %c0_46], %89 {strides = array<i32>} : memref<2x32xf32, #tpu.memory_space<vmem>>, vector<2x32xf32>,
    %c0_47 = arith.constant 0 : index
    %92 = arith.index_cast %57 : i32 to index
    %c0_48 = arith.constant 0 : index
    %c0_49 = arith.constant 0 : index
    %93 = vector.load %arg6[%c0_47, %92, %c0_48, %c0_49] : memref<1x4x2x32xf32, #tpu.memory_space<vmem>>, vector<1x1x2x32xf32>
    %94 = vector.shape_cast %93 : vector<1x1x2x32xf32> to vector<2x32xf32>
    %95 = vector.shape_cast %89 : vector<2x32xf32> to vector<1x1x2x32xf32>
    tpu.vector_store %arg6[%c0_47, %92, %c0_48, %c0_49], %95 {strides = array<i32>} : memref<1x4x2x32xf32, #tpu.memory_space<vmem>>, vector<1x1x2x32xf32>,
    %c2_i32_50 = arith.constant 2 : i32
    %c0_i32_51 = arith.constant 0 : i32
    %96 = arith.cmpi eq, %arg0, %c0_i32_51 : i32
    %c3_i32_52 = arith.constant 3 : i32
    %97 = arith.subi %c3_i32_52, %c2_i32_50 : i32
    %98 = arith.select %96, %c2_i32_50, %97 : i32
    %c2_i32_53 = arith.constant 2 : i32
    %99 = arith.muli %98, %c2_i32_53 : i32
    %100 = arith.index_cast %99 : i32 to index
    %c0_54 = arith.constant 0 : index
    %101 = vector.load %arg10[%100, %c0_54] : memref<8x128xf32, #tpu.memory_space<vmem>>, vector<2x128xf32>
    %c0_55 = arith.constant 0 : index
    %c0_56 = arith.constant 0 : index
    %102 = vector.load %arg8[%c0_55, %c0_56] : memref<2x32xf32, #tpu.memory_space<vmem>>, vector<2x32xf32>
    %c0_57 = arith.constant 0 : index
    %c0_58 = arith.constant 0 : index
    %103 = vector.load %arg9[%c0_57, %c0_58] : memref<2x32xf32, #tpu.memory_space<vmem>>, vector<2x32xf32>
    %cst_59 = arith.constant dense<0.000000e+00> : vector<2x128xf32>
    %104 = tpu.matmul %102, %13, %cst_59 {dimension_numbers = #tpu.dot_dimension_numbers<[1], [0], [0], [1], [0, 0, 1, 1], [], []>} : vector<2x32xf32>, vector<32x128xf32>, vector<2x128xf32> -> vector<2x128xf32>
    %105 = arith.addf %101, %104 : vector<2x128xf32>
    %106 = vector.extract_strided_slice %105 {offsets = [0, 0], sizes = [2, 32], strides = [1, 1]} : vector<2x128xf32> to vector<2x32xf32>
    %107 = arith.negf %106 : vector<2x32xf32>
    %108 = math.exp %107 : vector<2x32xf32>
    %cst_60 = arith.constant 1.000000e+00 : f32
    %109 = vector.broadcast %cst_60 : f32 to vector<2x32xf32>
    %110 = arith.addf %109, %108 : vector<2x32xf32>
    %111 = arith.divf %109, %110 : vector<2x32xf32>
    %112 = vector.extract_strided_slice %105 {offsets = [0, 32], sizes = [2, 32], strides = [1, 1]} : vector<2x128xf32> to vector<2x32xf32>
    %113 = arith.negf %112 : vector<2x32xf32>
    %114 = math.exp %113 : vector<2x32xf32>
    %cst_61 = arith.constant 1.000000e+00 : f32
    %115 = vector.broadcast %cst_61 : f32 to vector<2x32xf32>
    %116 = arith.addf %115, %114 : vector<2x32xf32>
    %117 = arith.divf %115, %116 : vector<2x32xf32>
    %118 = vector.extract_strided_slice %105 {offsets = [0, 64], sizes = [2, 32], strides = [1, 1]} : vector<2x128xf32> to vector<2x32xf32>
    %119 = math.tanh %118 : vector<2x32xf32>
    %120 = vector.extract_strided_slice %105 {offsets = [0, 96], sizes = [2, 32], strides = [1, 1]} : vector<2x128xf32> to vector<2x32xf32>
    %121 = arith.negf %120 : vector<2x32xf32>
    %122 = math.exp %121 : vector<2x32xf32>
    %cst_62 = arith.constant 1.000000e+00 : f32
    %123 = vector.broadcast %cst_62 : f32 to vector<2x32xf32>
    %124 = arith.addf %123, %122 : vector<2x32xf32>
    %125 = arith.divf %123, %124 : vector<2x32xf32>
    %126 = arith.mulf %117, %103 : vector<2x32xf32>
    %127 = arith.mulf %111, %119 : vector<2x32xf32>
    %128 = arith.addf %126, %127 : vector<2x32xf32>
    %129 = math.tanh %128 : vector<2x32xf32>
    %130 = arith.mulf %125, %129 : vector<2x32xf32>
    %c0_63 = arith.constant 0 : index
    %c0_64 = arith.constant 0 : index
    %131 = vector.load %arg9[%c0_63, %c0_64] : memref<2x32xf32, #tpu.memory_space<vmem>>, vector<2x32xf32>
    tpu.vector_store %arg9[%c0_63, %c0_64], %128 {strides = array<i32>} : memref<2x32xf32, #tpu.memory_space<vmem>>, vector<2x32xf32>,
    %c0_65 = arith.constant 0 : index
    %c0_66 = arith.constant 0 : index
    %132 = vector.load %arg8[%c0_65, %c0_66] : memref<2x32xf32, #tpu.memory_space<vmem>>, vector<2x32xf32>
    tpu.vector_store %arg8[%c0_65, %c0_66], %130 {strides = array<i32>} : memref<2x32xf32, #tpu.memory_space<vmem>>, vector<2x32xf32>,
    %c0_67 = arith.constant 0 : index
    %133 = arith.index_cast %98 : i32 to index
    %c0_68 = arith.constant 0 : index
    %c0_69 = arith.constant 0 : index
    %134 = vector.load %arg6[%c0_67, %133, %c0_68, %c0_69] : memref<1x4x2x32xf32, #tpu.memory_space<vmem>>, vector<1x1x2x32xf32>
    %135 = vector.shape_cast %134 : vector<1x1x2x32xf32> to vector<2x32xf32>
    %136 = vector.shape_cast %130 : vector<2x32xf32> to vector<1x1x2x32xf32>
    tpu.vector_store %arg6[%c0_67, %133, %c0_68, %c0_69], %136 {strides = array<i32>} : memref<1x4x2x32xf32, #tpu.memory_space<vmem>>, vector<1x1x2x32xf32>,
    %c3_i32_70 = arith.constant 3 : i32
    %c0_i32_71 = arith.constant 0 : i32
    %137 = arith.cmpi eq, %arg0, %c0_i32_71 : i32
    %c3_i32_72 = arith.constant 3 : i32
    %138 = arith.subi %c3_i32_72, %c3_i32_70 : i32
    %139 = arith.select %137, %c3_i32_70, %138 : i32
    %c2_i32_73 = arith.constant 2 : i32
    %140 = arith.muli %139, %c2_i32_73 : i32
    %141 = arith.index_cast %140 : i32 to index
    %c0_74 = arith.constant 0 : index
    %142 = vector.load %arg10[%141, %c0_74] : memref<8x128xf32, #tpu.memory_space<vmem>>, vector<2x128xf32>
    %c0_75 = arith.constant 0 : index
    %c0_76 = arith.constant 0 : index
    %143 = vector.load %arg8[%c0_75, %c0_76] : memref<2x32xf32, #tpu.memory_space<vmem>>, vector<2x32xf32>
    %c0_77 = arith.constant 0 : index
    %c0_78 = arith.constant 0 : index
    %144 = vector.load %arg9[%c0_77, %c0_78] : memref<2x32xf32, #tpu.memory_space<vmem>>, vector<2x32xf32>
    %cst_79 = arith.constant dense<0.000000e+00> : vector<2x128xf32>
    %145 = tpu.matmul %143, %13, %cst_79 {dimension_numbers = #tpu.dot_dimension_numbers<[1], [0], [0], [1], [0, 0, 1, 1], [], []>} : vector<2x32xf32>, vector<32x128xf32>, vector<2x128xf32> -> vector<2x128xf32>
    %146 = arith.addf %142, %145 : vector<2x128xf32>
    %147 = vector.extract_strided_slice %146 {offsets = [0, 0], sizes = [2, 32], strides = [1, 1]} : vector<2x128xf32> to vector<2x32xf32>
    %148 = arith.negf %147 : vector<2x32xf32>
    %149 = math.exp %148 : vector<2x32xf32>
    %cst_80 = arith.constant 1.000000e+00 : f32
    %150 = vector.broadcast %cst_80 : f32 to vector<2x32xf32>
    %151 = arith.addf %150, %149 : vector<2x32xf32>
    %152 = arith.divf %150, %151 : vector<2x32xf32>
    %153 = vector.extract_strided_slice %146 {offsets = [0, 32], sizes = [2, 32], strides = [1, 1]} : vector<2x128xf32> to vector<2x32xf32>
    %154 = arith.negf %153 : vector<2x32xf32>
    %155 = math.exp %154 : vector<2x32xf32>
    %cst_81 = arith.constant 1.000000e+00 : f32
    %156 = vector.broadcast %cst_81 : f32 to vector<2x32xf32>
    %157 = arith.addf %156, %155 : vector<2x32xf32>
    %158 = arith.divf %156, %157 : vector<2x32xf32>
    %159 = vector.extract_strided_slice %146 {offsets = [0, 64], sizes = [2, 32], strides = [1, 1]} : vector<2x128xf32> to vector<2x32xf32>
    %160 = math.tanh %159 : vector<2x32xf32>
    %161 = vector.extract_strided_slice %146 {offsets = [0, 96], sizes = [2, 32], strides = [1, 1]} : vector<2x128xf32> to vector<2x32xf32>
    %162 = arith.negf %161 : vector<2x32xf32>
    %163 = math.exp %162 : vector<2x32xf32>
    %cst_82 = arith.constant 1.000000e+00 : f32
    %164 = vector.broadcast %cst_82 : f32 to vector<2x32xf32>
    %165 = arith.addf %164, %163 : vector<2x32xf32>
    %166 = arith.divf %164, %165 : vector<2x32xf32>
    %167 = arith.mulf %158, %144 : vector<2x32xf32>
    %168 = arith.mulf %152, %160 : vector<2x32xf32>
    %169 = arith.addf %167, %168 : vector<2x32xf32>
    %170 = math.tanh %169 : vector<2x32xf32>
    %171 = arith.mulf %166, %170 : vector<2x32xf32>
    %c0_83 = arith.constant 0 : index
    %c0_84 = arith.constant 0 : index
    %172 = vector.load %arg9[%c0_83, %c0_84] : memref<2x32xf32, #tpu.memory_space<vmem>>, vector<2x32xf32>
    tpu.vector_store %arg9[%c0_83, %c0_84], %169 {strides = array<i32>} : memref<2x32xf32, #tpu.memory_space<vmem>>, vector<2x32xf32>,
    %c0_85 = arith.constant 0 : index
    %c0_86 = arith.constant 0 : index
    %173 = vector.load %arg8[%c0_85, %c0_86] : memref<2x32xf32, #tpu.memory_space<vmem>>, vector<2x32xf32>
    tpu.vector_store %arg8[%c0_85, %c0_86], %171 {strides = array<i32>} : memref<2x32xf32, #tpu.memory_space<vmem>>, vector<2x32xf32>,
    %c0_87 = arith.constant 0 : index
    %174 = arith.index_cast %139 : i32 to index
    %c0_88 = arith.constant 0 : index
    %c0_89 = arith.constant 0 : index
    %175 = vector.load %arg6[%c0_87, %174, %c0_88, %c0_89] : memref<1x4x2x32xf32, #tpu.memory_space<vmem>>, vector<1x1x2x32xf32>
    %176 = vector.shape_cast %175 : vector<1x1x2x32xf32> to vector<2x32xf32>
    %177 = vector.shape_cast %171 : vector<2x32xf32> to vector<1x1x2x32xf32>
    tpu.vector_store %arg6[%c0_87, %174, %c0_88, %c0_89], %177 {strides = array<i32>} : memref<1x4x2x32xf32, #tpu.memory_space<vmem>>, vector<1x1x2x32xf32>,
    %c4_i32 = arith.constant 4 : i32
    %c1_i32_90 = arith.constant 1 : i32
    %178 = arith.cmpi eq, %arg1, %c1_i32_90 : i32
    %179 = arith.extui %178 : i1 to i32
    %c0_i32_91 = arith.constant 0 : i32
    %180 = arith.cmpi ne, %179, %c0_i32_91 : i32
    scf.if %180 {
      %c0_92 = arith.constant 0 : index
      %c0_93 = arith.constant 0 : index
      %181 = vector.load %arg8[%c0_92, %c0_93] : memref<2x32xf32, #tpu.memory_space<vmem>>, vector<2x32xf32>
      %c0_94 = arith.constant 0 : index
      %c0_95 = arith.constant 0 : index
      %c0_96 = arith.constant 0 : index
      %182 = vector.load %arg7[%c0_94, %c0_95, %c0_96] : memref<1x2x32xf32, #tpu.memory_space<vmem>>, vector<1x2x32xf32>
      %183 = vector.shape_cast %182 : vector<1x2x32xf32> to vector<2x32xf32>
      %184 = vector.shape_cast %181 : vector<2x32xf32> to vector<1x2x32xf32>
      tpu.vector_store %arg7[%c0_94, %c0_95, %c0_96], %184 {strides = array<i32>} : memref<1x2x32xf32, #tpu.memory_space<vmem>>, vector<1x2x32xf32>,
    } else {
    }
    return
  }
  func.func @transform_0(%arg0: i32, %arg1: i32) -> (i32, i32) {
    %c2_i32 = arith.constant 2 : i32
    %0 = arith.muli %c2_i32, %arg1 : i32
    %c1_i32 = arith.constant 1 : i32
    %1 = arith.subi %c1_i32, %0 : i32
    %2 = arith.muli %arg0, %1 : i32
    %3 = arith.addi %arg1, %2 : i32
    %c0_i32 = arith.constant 0 : i32
    %c0_i32_0 = arith.constant 0 : i32
    return %3, %c0_i32 : i32, i32
  }
  func.func @transform_1(%arg0: i32, %arg1: i32) -> (i32, i32, i32) {
    %c0_i32 = arith.constant 0 : i32
    %c0_i32_0 = arith.constant 0 : i32
    %c0_i32_1 = arith.constant 0 : i32
    return %arg0, %c0_i32, %c0_i32_0 : i32, i32, i32
  }
  func.func @transform_2(%arg0: i32, %arg1: i32) -> (i32, i32, i32) {
    %c0_i32 = arith.constant 0 : i32
    %c0_i32_0 = arith.constant 0 : i32
    %c0_i32_1 = arith.constant 0 : i32
    return %arg0, %c0_i32, %c0_i32_0 : i32, i32, i32
  }
  func.func @transform_3(%arg0: i32, %arg1: i32) -> (i32, i32, i32) {
    %c0_i32 = arith.constant 0 : i32
    %c0_i32_0 = arith.constant 0 : i32
    %c0_i32_1 = arith.constant 0 : i32
    return %arg0, %c0_i32, %c0_i32_0 : i32, i32, i32
  }
  func.func @transform_4(%arg0: i32, %arg1: i32) -> (i32, i32, i32, i32) {
    %c2_i32 = arith.constant 2 : i32
    %0 = arith.muli %c2_i32, %arg1 : i32
    %c1_i32 = arith.constant 1 : i32
    %1 = arith.subi %c1_i32, %0 : i32
    %2 = arith.muli %arg0, %1 : i32
    %3 = arith.addi %arg1, %2 : i32
    %c0_i32 = arith.constant 0 : i32
    %c0_i32_0 = arith.constant 0 : i32
    %c0_i32_1 = arith.constant 0 : i32
    return %arg0, %3, %c0_i32, %c0_i32_0 : i32, i32, i32, i32
  }
  func.func @transform_5(%arg0: i32, %arg1: i32) -> (i32, i32, i32) {
    %c0_i32 = arith.constant 0 : i32
    %c0_i32_0 = arith.constant 0 : i32
    %c0_i32_1 = arith.constant 0 : i32
    return %arg0, %c0_i32, %c0_i32_0 : i32, i32, i32
  }
}

</mosaic_0001>

<llo_original>
// kernel: tpu_custom_call.1
$region0: #{tpu_custom_call.1}
  #allocation0 [shape = 'u32[]', space=smem, size = 0x4, offset = 0x4, fixed_abs, tag = 'smem constant byte address 0x4 - core index']
  #allocation1 [shape = 'u32[144,128]{1,0:T(1,128)}', space=vmem, size = 0x12000, scoped, tag = 'internal scratch']
  #allocation2 [shape = 'f32[2,32]{1,0:T(2,128)}', space=vmem, size = 0x400, scoped, tag = 'scratch operand']
  #allocation3 [shape = 'f32[2,32]{1,0:T(2,128)}', space=vmem, size = 0x400, scoped, tag = 'scratch operand']
  #allocation4 [shape = 'f32[8,128]{1,0:T(8,128)}', space=vmem, size = 0x1000, scoped, tag = 'scratch operand']
  %s0 = inlined_call_operand.hbm [shape: f32[16,16], index: 0, kind: input, shape index: {}]
  %s1 = inlined_call_operand.hbm [shape: f32[2,16,128], index: 1, kind: input, shape index: {}]
  %s2 = inlined_call_operand.hbm [shape: f32[2,32,128], index: 2, kind: input, shape index: {}]
  %s3 = inlined_call_operand.vmem [shape: f32[2,1,128], index: 3, kind: input, shape index: {}]
  %s4 = inlined_call_operand.hbm [shape: f32[2,8,2,32], index: 4, kind: output, shape index: {0}]
  %s5 = inlined_call_operand.hbm [shape: f32[2,2,32], index: 5, kind: output, shape index: {1}]
  %6 = xla_tuple %s4, %s5
  %s7 = sld [smem:[#allocation0]]
  $region77: #{tpu_custom_call.1} parent=0
    _
  %s9 = ssub.s32 1, %s7
  %s10 = scalar_select 0, %s9, %s7
  $region1: #{tpu_custom_call.1} parent=0
    #allocation5 [shape = 'u8[8192]{0}', space=vmem, size = 0x2000, scoped, tag = 'input window, operand 0']
    #allocation6 [shape = 's32[2]{0}', space=sflag, size = 0x8, scoped, tag = 'scoped memory for tpu_custom_call.1']
    #allocation7 [shape = 's32[2]{0}', space=sflag, size = 0x8, scoped, tag = 'scoped memory for tpu_custom_call.1']
    #allocation8 [shape = 'u8[16384]{0}', space=vmem, size = 0x4000, scoped, tag = 'input window, operand 1']
    #allocation9 [shape = 's32[2]{0}', space=sflag, size = 0x8, scoped, tag = 'scoped memory for tpu_custom_call.1']
    #allocation10 [shape = 'u8[32768]{0}', space=vmem, size = 0x8000, scoped, tag = 'input window, operand 2']
    #allocation11 [shape = 'u8[8192]{0}', space=vmem, size = 0x2000, scoped, tag = 'output window, operand 0']
    #allocation12 [shape = 'u8[2048]{0}', space=vmem, size = 0x800, scoped, tag = 'output window, operand 1']
    #allocation13 [shape = 's32[2]{0}', space=sflag, size = 0x8, scoped, tag = 'scoped memory for tpu_custom_call.1']
    %11 = vsyncpa [#allocation6], 0
    %s12 = scalar_lea.sflag [#allocation6], 1
    %13 = vsyncpa %s12, 0
    %14 = vsyncpa [#allocation9], 0
    %s15 = scalar_lea.sflag [#allocation9], 1
    %16 = vsyncpa %s15, 0
    %17 = vsyncpa [#allocation7], 0
    %s18 = scalar_lea.sflag [#allocation7], 1
    %19 = vsyncpa %s18, 0
    %20 = vsyncpa [#allocation13], 0
    %s21 = scalar_lea.sflag [#allocation13], 1
    %22 = vsyncpa %s21, 0
    loop: start=0, step=1, limit=6
    $region2: #{tpu_custom_call.1} parent=1 // loop_pre_header
      _
    $region3: #{tpu_custom_call.1} parent=1 // loop_header
      %s24 = sphi 0, %s28
      %p25 = scmp.ge.s32.totalorder %s24, 6
      %s31 = sphi 0, %s43
      %s32 = sphi 0, %s39
      %s33 = sphi 0, %s31
      %s34 = sphi 0, %s32
      %s35 = sphi 0, %s33
      %s36 = sphi 0, %s34
      %s54 = sphi 0, %s56
      %s57 = sphi 0, %s54
      %s58 = sphi 0, %s57
      %s74 = sphi 0, %s58
      %s80 = sphi 0, %s82
      %s83 = sphi 0, %s80
      %s84 = sphi 0, %s83
      %s100 = sphi 0, %s84
      %s106 = sphi 0, %s108
      %s109 = sphi 0, %s106
      %s110 = sphi 0, %s109
      %s126 = sphi 0, %s110
      %s132 = sphi 0, %s134
      %s135 = sphi 0, %s132
      %s136 = sphi 0, %s135
      %s152 = sphi 0, %s136
      %s168 = sphi 0, %s170
      %s171 = sphi 0, %s168
      %s172 = sphi 0, %s171
      %s188 = sphi 0, %s172
      %s194 = sphi 0, %s196
      %s197 = sphi 0, %s194
      %s198 = sphi 0, %s197
      %s214 = sphi 0, %s198
    $region4: #{tpu_custom_call.1} parent=1 // loop_header_branch
      %27 = sbr.rel (%p25) target = $region8
    $region5: #{tpu_custom_call.1} parent=1 // loop_body
      %s29 = ssub.s32 %s24, 1
      %s30 = ssub.s32 %s24, 2
      %s37 = sadd.s32 1, %s32
      %p38 = scmp.ge.s32.totalorder %s37, 2
      %s39 = scalar_select %p38, 0, %s37
      %s40 = sadd.s32 1, %s31
      %s41 = scalar_select %p38, %s40, %s31
      %p42 = scmp.ge.s32.totalorder %s41, 2
      %s43 = scalar_select %p42, 0, %s41
      %s44 = smul.u32 %s32, 2
      %s45 = ssub.s32 1, %s44
      %s46 = smul.u32 %s31, %s45
      %s47 = sadd.s32 %s32, %s46
      %s48 = smul.u32 %s39, 2
      %s49 = ssub.s32 1, %s48
      %s50 = smul.u32 %s43, %s49
      %s51 = sadd.s32 %s39, %s50
      %s52 = ssub.s32 %s47, %s51
      %p53 = scmp.eq.s32.totalorder %s52, 0
      %s55 = sadd.s32 %s54, 1
      %s56 = scalar_select %p53, %s54, %s55
      %p59 = pneg %p53
      %p60 = scmp.eq.s32.totalorder %s24, 3
      %p61 = por %p59, %p60
      %p62 = scmp.ne.s32.totalorder %s54, %s57
      %p63 = scmp.eq.s32.totalorder %s24, 0
      %p64 = por %p62, %p63
      %p65 = scmp.ne.s32.totalorder %s54, %s57
      %p66 = scmp.eq.s32.totalorder %s29, 3
      %p67 = por %p65, %p66
      %p68 = scmp.ne.s32.totalorder %s57, %s58
      %p69 = scmp.eq.s32.totalorder %s29, 0
      %p70 = por %p68, %p69
      %p71 = scmp.ne.s32.totalorder %s57, %s58
      %p72 = scmp.eq.s32.totalorder %s30, 3
      %p73 = por %p71, %p72
      %p75 = scmp.ne.s32.totalorder %s58, %s74
      %p76 = scmp.eq.s32.totalorder %s30, 0
      %p77 = por %p75, %p76
      %s78 = ssub.s32 %s31, %s43
      %p79 = scmp.eq.s32.totalorder %s78, 0
      %s81 = sadd.s32 %s80, 1
      %s82 = scalar_select %p79, %s80, %s81
      %p85 = pneg %p79
      %p86 = scmp.eq.s32.totalorder %s24, 3
      %p87 = por %p85, %p86
      %p88 = scmp.ne.s32.totalorder %s80, %s83
      %p89 = scmp.eq.s32.totalorder %s24, 0
      %p90 = por %p88, %p89
      %p91 = scmp.ne.s32.totalorder %s80, %s83
      %p92 = scmp.eq.s32.totalorder %s29, 3
      %p93 = por %p91, %p92
      %p94 = scmp.ne.s32.totalorder %s83, %s84
      %p95 = scmp.eq.s32.totalorder %s29, 0
      %p96 = por %p94, %p95
      %p97 = scmp.ne.s32.totalorder %s83, %s84
      %p98 = scmp.eq.s32.totalorder %s30, 3
      %p99 = por %p97, %p98
      %p101 = scmp.ne.s32.totalorder %s84, %s100
      %p102 = scmp.eq.s32.totalorder %s30, 0
      %p103 = por %p101, %p102
      %s104 = ssub.s32 %s31, %s43
      %p105 = scmp.eq.s32.totalorder %s104, 0
      %s107 = sadd.s32 %s106, 1
      %s108 = scalar_select %p105, %s106, %s107
      %p111 = pneg %p105
      %p112 = scmp.eq.s32.totalorder %s24, 3
      %p113 = por %p111, %p112
      %p114 = scmp.ne.s32.totalorder %s106, %s109
      %p115 = scmp.eq.s32.totalorder %s24, 0
      %p116 = por %p114, %p115
      %p117 = scmp.ne.s32.totalorder %s106, %s109
      %p118 = scmp.eq.s32.totalorder %s29, 3
      %p119 = por %p117, %p118
      %p120 = scmp.ne.s32.totalorder %s109, %s110
      %p121 = scmp.eq.s32.totalorder %s29, 0
      %p122 = por %p120, %p121
      %p123 = scmp.ne.s32.totalorder %s109, %s110
      %p124 = scmp.eq.s32.totalorder %s30, 3
      %p125 = por %p123, %p124
      %p127 = scmp.ne.s32.totalorder %s110, %s126
      %p128 = scmp.eq.s32.totalorder %s30, 0
      %p129 = por %p127, %p128
      %s130 = ssub.s32 %s31, %s43
      %p131 = scmp.eq.s32.totalorder %s130, 0
      %s133 = sadd.s32 %s132, 1
      %s134 = scalar_select %p131, %s132, %s133
      %p137 = pneg %p131
      %p138 = scmp.eq.s32.totalorder %s24, 3
      %p139 = por %p137, %p138
      %p140 = scmp.ne.s32.totalorder %s132, %s135
      %p141 = scmp.eq.s32.totalorder %s24, 0
      %p142 = por %p140, %p141
      %p143 = scmp.ne.s32.totalorder %s132, %s135
      %p144 = scmp.eq.s32.totalorder %s29, 3
      %p145 = por %p143, %p144
      %p146 = scmp.ne.s32.totalorder %s135, %s136
      %p147 = scmp.eq.s32.totalorder %s29, 0
      %p148 = por %p146, %p147
      %p149 = scmp.ne.s32.totalorder %s135, %s136
      %p150 = scmp.eq.s32.totalorder %s30, 3
      %p151 = por %p149, %p150
      %p153 = scmp.ne.s32.totalorder %s136, %s152
      %p154 = scmp.eq.s32.totalorder %s30, 0
      %p155 = por %p153, %p154
      %s156 = smul.u32 %s32, 2
      %s157 = ssub.s32 1, %s156
      %s158 = smul.u32 %s31, %s157
      %s159 = sadd.s32 %s32, %s158
      %s160 = smul.u32 %s39, 2
      %s161 = ssub.s32 1, %s160
      %s162 = smul.u32 %s43, %s161
      %s163 = sadd.s32 %s39, %s162
      %s164 = ssub.s32 %s31, %s43
      %s165 = ssub.s32 %s159, %s163
      %s166 = sor.u32 %s164, %s165
      %p167 = scmp.eq.s32.totalorder %s166, 0
      %s169 = sadd.s32 %s168, 1
      %s170 = scalar_select %p167, %s168, %s169
      %p173 = pneg %p167
      %p174 = scmp.eq.s32.totalorder %s24, 3
      %p175 = por %p173, %p174
      %p176 = scmp.ne.s32.totalorder %s168, %s171
      %p177 = scmp.eq.s32.totalorder %s24, 0
      %p178 = por %p176, %p177
      %p179 = scmp.ne.s32.totalorder %s168, %s171
      %p180 = scmp.eq.s32.totalorder %s29, 3
      %p181 = por %p179, %p180
      %p182 = scmp.ne.s32.totalorder %s171, %s172
      %p183 = scmp.eq.s32.totalorder %s29, 0
      %p184 = por %p182, %p183
      %p185 = scmp.ne.s32.totalorder %s171, %s172
      %p186 = scmp.eq.s32.totalorder %s30, 3
      %p187 = por %p185, %p186
      %p189 = scmp.ne.s32.totalorder %s172, %s188
      %p190 = scmp.eq.s32.totalorder %s30, 0
      %p191 = por %p189, %p190
      %s192 = ssub.s32 %s31, %s43
      %p193 = scmp.eq.s32.totalorder %s192, 0
      %s195 = sadd.s32 %s194, 1
      %s196 = scalar_select %p193, %s194, %s195
      %p199 = pneg %p193
      %p200 = scmp.eq.s32.totalorder %s24, 3
      %p201 = por %p199, %p200
      %p202 = scmp.ne.s32.totalorder %s194, %s197
      %p203 = scmp.eq.s32.totalorder %s24, 0
      %p204 = por %p202, %p203
      %p205 = scmp.ne.s32.totalorder %s194, %s197
      %p206 = scmp.eq.s32.totalorder %s29, 3
      %p207 = por %p205, %p206
      %p208 = scmp.ne.s32.totalorder %s197, %s198
      %p209 = scmp.eq.s32.totalorder %s29, 0
      %p210 = por %p208, %p209
      %p211 = scmp.ne.s32.totalorder %s197, %s198
      %p212 = scmp.eq.s32.totalorder %s30, 3
      %p213 = por %p211, %p212
      %p215 = scmp.ne.s32.totalorder %s198, %s214
      %p216 = scmp.eq.s32.totalorder %s30, 0
      %p217 = por %p215, %p216
      %p218 = scmp.le.s32.totalorder 1, %s24
      %p219 = scmp.lt.s32.totalorder %s24, 5
      %p220 = pnand %p218, %p219
      %p221 = pneg %p220
      // Predicated region
      $region9: #{tpu_custom_call.1} parent=5 // pred_check
        _
      $region10: #{tpu_custom_call.1} parent=5 // pred_check_branch
        %223 = sbr.rel (%p220) target = $region12
      $region11: #{tpu_custom_call.1} parent=5 // pred_region
        %s224 = ssub.s32 %s24, 1
      $region12: #{tpu_custom_call.1} parent=5 // pred_fallthru
        _
      %p225 = scmp.lt.s32.totalorder %s24, 4
      // Predicated region
      $region13: #{tpu_custom_call.1} parent=5 // pred_check
        %p226 = pneg %p225
      $region14: #{tpu_custom_call.1} parent=5 // pred_check_branch
        %228 = sbr.rel (%p226) target = $region16
      $region15: #{tpu_custom_call.1} parent=5 // pred_region
        // Predicated region
        $region17: #{tpu_custom_call.1} parent=15 // pred_check
          %p229 = pneg %p64
        $region18: #{tpu_custom_call.1} parent=15 // pred_check_branch
          %231 = sbr.rel (%p229) target = $region20
        $region19: #{tpu_custom_call.1} parent=15 // pred_region
          %s232 = sand.u32 %s54, 1
          %s233 = scalar_lea.sflag [#allocation6], %s232
          %s234 = sand.u32 %s54, 1
          %s235 = smul.addr %s234, 8
          %s236 = scalar_lea.vmem [#allocation5], %s235
          %s237 = smul.u32 %s32, 2
          %s238 = ssub.s32 1, %s237
          %s239 = smul.u32 %s31, %s238
          %s240 = sadd.s32 %s32, %s239
          %s242 = ssub.s32 128, 128
          %243 = vsyncadd %s233, %s242
          %s244 = smul.addr %s240, 128
          %s245 = scalar_lea.hbm %s0, %s244
          %s247 = sshll.u32 %s236, 4
          %s248 = int_to_ptr.vmem [resolvable:$true] %s247
          %250 = dma.hbm_to_vmem [thread:$0]  %s245, 128, %s248, %s233
        $region20: #{tpu_custom_call.1} parent=15 // pred_fallthru
          _
        // Predicated region
        $region21: #{tpu_custom_call.1} parent=15 // pred_check
          %p251 = pneg %p90
        $region22: #{tpu_custom_call.1} parent=15 // pred_check_branch
          %253 = sbr.rel (%p251) target = $region24
        $region23: #{tpu_custom_call.1} parent=15 // pred_region
          %s254 = sand.u32 %s24, 1
          %s255 = scalar_lea.sflag [#allocation9], %s254
          %s256 = sand.u32 %s80, 1
          %s257 = smul.addr %s256, 16
          %s258 = scalar_lea.vmem [#allocation8], %s257
          %s260 = ssub.s32 256, 256
          %261 = vsyncadd %s255, %s260
          %s262 = smul.addr %s31, 2
          %s263 = smul.addr %s262, 128
          %s264 = scalar_lea.hbm %s1, %s263
          %s265 = sshll.u32 %s258, 4
          %s266 = int_to_ptr.vmem [resolvable:$true] %s265
          %271 = dma.hbm_to_vmem [thread:$0]  %s264, 256, %s266, %s255, 128, 128, 8
        $region24: #{tpu_custom_call.1} parent=15 // pred_fallthru
          _
        // Predicated region
        $region25: #{tpu_custom_call.1} parent=15 // pred_check
          %p272 = pneg %p116
        $region26: #{tpu_custom_call.1} parent=15 // pred_check_branch
          %274 = sbr.rel (%p272) target = $region28
        $region27: #{tpu_custom_call.1} parent=15 // pred_region
          %s275 = sand.u32 %s24, 1
          %s276 = scalar_lea.sflag [#allocation9], %s275
          %s277 = sand.u32 %s106, 1
          %s278 = smul.addr %s277, 32
          %s279 = scalar_lea.vmem [#allocation10], %s278
          %s281 = ssub.s32 512, 512
          %282 = vsyncadd %s276, %s281
          %s283 = smul.addr %s31, 4
          %s284 = smul.addr %s283, 128
          %s285 = scalar_lea.hbm %s2, %s284
          %s286 = sshll.u32 %s279, 4
          %s287 = int_to_ptr.vmem [resolvable:$true] %s286
          %292 = dma.hbm_to_vmem [thread:$0]  %s285, 512, %s287, %s276, 128, 128, 8
        $region28: #{tpu_custom_call.1} parent=15 // pred_fallthru
          _
        // Predicated region
        $region29: #{tpu_custom_call.1} parent=15 // pred_check
          %p293 = pneg %p142
        $region30: #{tpu_custom_call.1} parent=15 // pred_check_branch
          %295 = sbr.rel (%p293) target = $region32
        $region31: #{tpu_custom_call.1} parent=15 // pred_region
          %p296 = scmp.lt.s32.totalorder %s31, 1
          %s297 = scalar_select %p296, %s31, 1
          %s298 = scalar_lea.vmem %s3, %s297
        $region32: #{tpu_custom_call.1} parent=15 // pred_fallthru
          _
      $region16: #{tpu_custom_call.1} parent=5 // pred_fallthru
        _
      %p299 = scmp.le.s32.totalorder 1, %s24
      %p300 = scmp.lt.s32.totalorder %s24, 5
      %p301 = pnand %p299, %p300
      %p302 = pneg %p301
      // Predicated region
      $region33: #{tpu_custom_call.1} parent=5 // pred_check
        _
      $region34: #{tpu_custom_call.1} parent=5 // pred_check_branch
        %304 = sbr.rel (%p301) target = $region36
      $region35: #{tpu_custom_call.1} parent=5 // pred_region
        %s305 = ssub.s32 %s24, 1
        %s306 = sand.u32 %s57, 1
        %s307 = scalar_lea.sflag [#allocation6], %s306
        %s308 = sand.u32 %s57, 1
        %s309 = smul.addr %s308, 8
        %s310 = scalar_lea.vmem [#allocation5], %s309
        // Predicated region
        $region37: #{tpu_custom_call.1} parent=35 // pred_check
          %p311 = pneg %p70
        $region38: #{tpu_custom_call.1} parent=35 // pred_check_branch
          %313 = sbr.rel (%p311) target = $region40
        $region39: #{tpu_custom_call.1} parent=35 // pred_region
          %314 = dma.done %s307, 128
        $region40: #{tpu_custom_call.1} parent=35 // pred_fallthru
          _
        %s315 = sand.u32 %s29, 1
        %s316 = scalar_lea.sflag [#allocation9], %s315
        %s317 = sand.u32 %s83, 1
        %s318 = smul.addr %s317, 16
        %s319 = scalar_lea.vmem [#allocation8], %s318
        // Predicated region
        $region41: #{tpu_custom_call.1} parent=35 // pred_check
          %p320 = pneg %p96
        $region42: #{tpu_custom_call.1} parent=35 // pred_check_branch
          %322 = sbr.rel (%p320) target = $region44
        $region43: #{tpu_custom_call.1} parent=35 // pred_region
          %323 = dma.done %s316, 256
        $region44: #{tpu_custom_call.1} parent=35 // pred_fallthru
          _
        %s324 = sand.u32 %s29, 1
        %s325 = scalar_lea.sflag [#allocation9], %s324
        %s326 = sand.u32 %s109, 1
        %s327 = smul.addr %s326, 32
        %s328 = scalar_lea.vmem [#allocation10], %s327
        // Predicated region
        $region45: #{tpu_custom_call.1} parent=35 // pred_check
          %p329 = pneg %p122
        $region46: #{tpu_custom_call.1} parent=35 // pred_check_branch
          %331 = sbr.rel (%p329) target = $region48
        $region47: #{tpu_custom_call.1} parent=35 // pred_region
          %332 = dma.done %s325, 512
        $region48: #{tpu_custom_call.1} parent=35 // pred_fallthru
          _
        %s333 = sand.u32 %s57, 1
        %s334 = scalar_lea.sflag [#allocation6], %s333
        %s335 = sand.u32 %s57, 1
        %s336 = smul.addr %s335, 8
        %s337 = scalar_lea.vmem [#allocation5], %s336
        %p338 = pneg %p70
        %p339 = pneg %p67
        %s340 = sand.u32 %s29, 1
        %s341 = scalar_lea.sflag [#allocation9], %s340
        %s342 = sand.u32 %s83, 1
        %s343 = smul.addr %s342, 16
        %s344 = scalar_lea.vmem [#allocation8], %s343
        %p345 = pneg %p96
        %p346 = pneg %p93
        %s347 = sand.u32 %s29, 1
        %s348 = scalar_lea.sflag [#allocation9], %s347
        %s349 = sand.u32 %s109, 1
        %s350 = smul.addr %s349, 32
        %s351 = scalar_lea.vmem [#allocation10], %s350
        %p352 = pneg %p122
        %p353 = pneg %p119
        %p354 = scmp.lt.s32.totalorder %s33, 1
        %s355 = scalar_select %p354, %s33, 1
        %s356 = scalar_lea.vmem %s3, %s355
        %p357 = pneg %p148
        %p358 = pneg %p145
        %p359 = pneg %p184
        %p360 = pneg %p181
        %s361 = sand.u32 %s171, 1
        %s362 = scalar_lea.sflag [#allocation7], %s361
        %s363 = sand.u32 %s171, 1
        %s364 = smul.addr %s363, 8
        %s365 = scalar_lea.vmem [#allocation11], %s364
        %p366 = pneg %p210
        %p367 = pneg %p207
        %s368 = sand.u32 %s197, 1
        %s369 = scalar_lea.sflag [#allocation13], %s368
        %s370 = sand.u32 %s197, 1
        %s371 = smul.addr %s370, 2
        %s372 = scalar_lea.vmem [#allocation12], %s371
        %s373 = smul.u32 %s34, 2
        %s374 = ssub.s32 1, %s373
        %s375 = smul.u32 %s33, %s374
        %s376 = sadd.s32 %s34, %s375
        %p377 = scmp.lt.s32.totalorder %s33, 1
        %s378 = scalar_select %p377, %s33, 1
        %s379 = scalar_lea.vmem %s3, %s378
        %s380 = smul.u32 %s34, 2
        %s381 = ssub.s32 1, %s380
        %s382 = smul.u32 %s33, %s381
        %s383 = sadd.s32 %s34, %s382
        %s384 = smul.u32 4, %s383
        %p385 = scmp.eq.s32.totalorder %s34, 0
        // Predicated region
        $region49: #{tpu_custom_call.1} parent=35 // pred_check
          %p386 = pneg %p385
        $region50: #{tpu_custom_call.1} parent=35 // pred_check_branch
          %388 = sbr.rel (%p386) target = $region52
        $region51: #{tpu_custom_call.1} parent=35 // pred_region
          %vm389 = vcmask 254976
          %390 = vst.msk [vmem:[#allocation2] sm:$0x3] %vm389, 0.0
          %391 = vst.msk [vmem:[#allocation3] sm:$0x3] %vm389, 0.0
        $region52: #{tpu_custom_call.1} parent=35 // pred_fallthru
          _
        %v392 = vld [vmem:[%s310] sm:$0xff]
        %v393 = vld [vmem:[%s319] sm:$0xff]
        %v394 = vld [vmem:[%s319 + $0x8] sm:$0xff]
        %v395 = vld [vmem:[%s379] sm:$0x1]
        %v397 = vlaneseq
        %v398 = vshrl.u32 %v397, 7
        %v399 = vsub.s32 0, %v398
        %v400 = vrot.slane %v395, %v399
        %vm402 = vcmask 130048
        %v404 = vsel %vm402, %v392, 0
        %406 = vmatprep.subr.mxu0 0.0
        %407 = vmatpush1.msra.mxu0 0.0
        %408 = vmatprep.subr.mxu0 0.0
        %409 = vmatpush1.msra.mxu0 0.0
        %410 = vmatprep.subr.mxu0 0.0
        %411 = vmatpush1.msra.mxu0 0.0
        %412 = vmatprep.subr.mxu0 0.0
        %413 = vmatpush1.msra.mxu0 0.0
        %414 = vmatprep.subr.mxu0 0.0
        %415 = vmatpush1.msra.mxu0 0.0
        %416 = vmatprep.subr.mxu0 0.0
        %417 = vmatpush1.msra.mxu0 0.0
        %418 = vmatprep.subr.mxu0 0.0
        %419 = vmatpush1.msra.mxu0 0.0
        %420 = vmatprep.subr.mxu0 0.0
        %421 = vmatpush1.msra.mxu0 0.0
        %422 = vmatprep.subr.mxu0 0.0
        %423 = vmatpush1.msra.mxu0 0.0
        %424 = vmatprep.subr.mxu0 0.0
        %425 = vmatpush1.msra.mxu0 0.0
        %426 = vmatprep.subr.mxu0 0.0
        %427 = vmatpush1.msra.mxu0 0.0
        %428 = vmatprep.subr.mxu0 0.0
        %429 = vmatpush1.msra.mxu0 0.0
        %430 = vmatprep.subr.mxu0 0.0
        %431 = vmatpush1.msra.mxu0 0.0
        %432 = vmatprep.subr.mxu0 0.0
        %433 = vmatpush1.msra.mxu0 0.0
        %434 = vmatprep.subr.mxu0 0.0
        %435 = vmatpush1.msra.mxu0 %v394
        %436 = vmatprep.subr.mxu0 0.0
        %437 = vmatpush1.msra.mxu0 %v393
        %438 = vmatprep.subr.mxu0 0.0
        %439 = vmatpush2.msra.mxu0 0.0
        %440 = vmatprep.subr.mxu0 0.0
        %441 = vmatpush2.msra.mxu0 0.0
        %442 = vmatprep.subr.mxu0 0.0
        %443 = vmatpush2.msra.mxu0 0.0
        %444 = vmatprep.subr.mxu0 0.0
        %445 = vmatpush2.msra.mxu0 0.0
        %446 = vmatprep.subr.mxu0 0.0
        %447 = vmatpush2.msra.mxu0 0.0
        %448 = vmatprep.subr.mxu0 0.0
        %449 = vmatpush2.msra.mxu0 0.0
        %450 = vmatprep.subr.mxu0 0.0
        %451 = vmatpush2.msra.mxu0 0.0
        %452 = vmatprep.subr.mxu0 0.0
        %453 = vmatpush2.msra.mxu0 0.0
        %454 = vmatprep.subr.mxu0 0.0
        %455 = vmatpush2.msra.mxu0 0.0
        %456 = vmatprep.subr.mxu0 0.0
        %457 = vmatpush2.msra.mxu0 0.0
        %458 = vmatprep.subr.mxu0 0.0
        %459 = vmatpush2.msra.mxu0 0.0
        %460 = vmatprep.subr.mxu0 0.0
        %461 = vmatpush2.msra.mxu0 0.0
        %462 = vmatprep.subr.mxu0 0.0
        %463 = vmatpush2.msra.mxu0 0.0
        %464 = vmatprep.subr.mxu0 0.0
        %465 = vmatpush2.msra.mxu0 0.0
        %466 = vmatprep.subr.mxu0 0.0
        %467 = vmatpush2.msra.mxu0 0.0
        %468 = vmatprep.subr.mxu0 0.0
        %469 = vmatpush2.msra.mxu0 0.0
        %470 = vmatprep.mubr.f32.mxu0 0.0
        %471 = vmatmul.mubr.f32.gmra.mxu0 %v404
        %v472 = vpop.f32.mrf.mxu0
        %v473 = vadd.f32 %v400, %v472
        %v474 = vpop.f32.mrf.mxu0
        %475 = vdwg.mxu0
        %476 = vst [vmem:[#allocation4] sm:$0xff] %v473
        %v477 = vld [vmem:[%s328] sm:$0xff]
        %v478 = vld [vmem:[%s328 + $0x8] sm:$0xff]
        %v479 = vld [vmem:[%s328 + $0x10] sm:$0xff]
        %v480 = vld [vmem:[%s328 + $0x18] sm:$0xff]
        %p481 = scmp.eq.s32.totalorder %s33, 0
        %s482 = scalar_select %p481, 0, 3
        %s483 = smul.u32 %s482, 2
        %s484 = scalar_lea.vmem [#allocation4], %s483
        %v485 = vld [vmem:[%s484] sm:$0x3]
        %v486 = vld [vmem:[#allocation2] sm:$0x3]
        %v487 = vld [vmem:[#allocation3] sm:$0x3]
        %vm488 = vcmask 261120
        %v490 = vsel %vm488, %v486, 0
        %492 = vmatprep.subr.mxu0 0.0
        %493 = vmatpush1.msra.mxu0 0.0
        %494 = vmatprep.subr.mxu0 0.0
        %495 = vmatpush1.msra.mxu0 0.0
        %496 = vmatprep.subr.mxu0 0.0
        %497 = vmatpush1.msra.mxu0 0.0
        %498 = vmatprep.subr.mxu0 0.0
        %499 = vmatpush1.msra.mxu0 0.0
        %500 = vmatprep.subr.mxu0 0.0
        %501 = vmatpush1.msra.mxu0 0.0
        %502 = vmatprep.subr.mxu0 0.0
        %503 = vmatpush1.msra.mxu0 0.0
        %504 = vmatprep.subr.mxu0 0.0
        %505 = vmatpush1.msra.mxu0 0.0
        %506 = vmatprep.subr.mxu0 0.0
        %507 = vmatpush1.msra.mxu0 0.0
        %508 = vmatprep.subr.mxu0 0.0
        %509 = vmatpush1.msra.mxu0 0.0
        %510 = vmatprep.subr.mxu0 0.0
        %511 = vmatpush1.msra.mxu0 0.0
        %512 = vmatprep.subr.mxu0 0.0
        %513 = vmatpush1.msra.mxu0 0.0
        %514 = vmatprep.subr.mxu0 0.0
        %515 = vmatpush1.msra.mxu0 0.0
        %516 = vmatprep.subr.mxu0 0.0
        %517 = vmatpush1.msra.mxu0 %v480
        %518 = vmatprep.subr.mxu0 0.0
        %519 = vmatpush1.msra.mxu0 %v479
        %520 = vmatprep.subr.mxu0 0.0
        %521 = vmatpush1.msra.mxu0 %v478
        %522 = vmatprep.subr.mxu0 0.0
        %523 = vmatpush1.msra.mxu0 %v477
        %524 = vmatprep.subr.mxu0 0.0
        %525 = vmatpush2.msra.mxu0 0.0
        %526 = vmatprep.subr.mxu0 0.0
        %527 = vmatpush2.msra.mxu0 0.0
        %528 = vmatprep.subr.mxu0 0.0
        %529 = vmatpush2.msra.mxu0 0.0
        %530 = vmatprep.subr.mxu0 0.0
        %531 = vmatpush2.msra.mxu0 0.0
        %532 = vmatprep.subr.mxu0 0.0
        %533 = vmatpush2.msra.mxu0 0.0
        %534 = vmatprep.subr.mxu0 0.0
        %535 = vmatpush2.msra.mxu0 0.0
        %536 = vmatprep.subr.mxu0 0.0
        %537 = vmatpush2.msra.mxu0 0.0
        %538 = vmatprep.subr.mxu0 0.0
        %539 = vmatpush2.msra.mxu0 0.0
        %540 = vmatprep.subr.mxu0 0.0
        %541 = vmatpush2.msra.mxu0 0.0
        %542 = vmatprep.subr.mxu0 0.0
        %543 = vmatpush2.msra.mxu0 0.0
        %544 = vmatprep.subr.mxu0 0.0
        %545 = vmatpush2.msra.mxu0 0.0
        %546 = vmatprep.subr.mxu0 0.0
        %547 = vmatpush2.msra.mxu0 0.0
        %548 = vmatprep.subr.mxu0 0.0
        %549 = vmatpush2.msra.mxu0 0.0
        %550 = vmatprep.subr.mxu0 0.0
        %551 = vmatpush2.msra.mxu0 0.0
        %552 = vmatprep.subr.mxu0 0.0
        %553 = vmatpush2.msra.mxu0 0.0
        %554 = vmatprep.subr.mxu0 0.0
        %555 = vmatpush2.msra.mxu0 0.0
        %556 = vmatprep.mubr.f32.mxu0 0.0
        %557 = vmatmul.mubr.f32.gmra.mxu0 %v490
        %v558 = vpop.f32.mrf.mxu0
        %v559 = vadd.f32 0.0, %v558
        %v560 = vpop.f32.mrf.mxu0
        %561 = vdwg.mxu0
        %v562 = vadd.f32 %v485, %v559
        %v563 = vxor.u32 %v562, 2147483648
        %v564 = vmul.f32 %v563, 1.442695
        %v565 = vpow.pop %v564
        %v566 = vadd.f32 %v565, 1.0
        %v567 = vrcp.pop %v566
        %v568 = vmul.f32 1.0, %v567
        %v569 = vtanh.pop %v562
        %571 = vrot.lane.b32.xlu0 %v487, 32
        %v572 = vpop.permute.xlu0 %571
        %v574 = vmul.f32 %v568, %v572
        %576 = vrot.lane.b32.xlu0 %v569, 64
        %v577 = vpop.permute.xlu0 %576
        %v579 = vmul.f32 %v568, %v577
        %581 = vrot.lane.b32.xlu0 %v579, 32
        %v582 = vpop.permute.xlu0 %581
        %v584 = vadd.f32 %v574, %v582
        %v585 = vtanh.pop %v584
        %587 = vrot.lane.b32.xlu0 %v585, 64
        %v588 = vpop.permute.xlu0 %587
        %v590 = vmul.f32 %v568, %v588
        %592 = vrot.lane.b32.xlu0 %v584, 96
        %v593 = vpop.permute.xlu0 %592
        %vm595 = vcmask 254976
        %596 = vst.msk [vmem:[#allocation3] sm:$0x3] %vm595, %v593
        %598 = vrot.lane.b32.xlu0 %v590, 32
        %v599 = vpop.permute.xlu0 %598
        %601 = vst.msk [vmem:[#allocation2] sm:$0x3] %vm595, %v599
        %s602 = scalar_lea.vmem %s365, %s483 [#allocation11]
        %603 = vst.msk [vmem:[%s602] sm:$0x3] %vm595, %v599
        %s604 = scalar_select %p481, 1, 2
        %s605 = smul.u32 %s604, 2
        %s606 = scalar_lea.vmem [#allocation4], %s605
        %v607 = vld [vmem:[%s606] sm:$0x3]
        %v608 = vld [vmem:[#allocation2] sm:$0x3]
        %v609 = vld [vmem:[#allocation3] sm:$0x3]
        %v611 = vsel %vm488, %v608, 0
        %613 = vmatprep.subr.mxu0 0.0
        %614 = vmatpush1.msra.mxu0 0.0
        %615 = vmatprep.subr.mxu0 0.0
        %616 = vmatpush1.msra.mxu0 0.0
        %617 = vmatprep.subr.mxu0 0.0
        %618 = vmatpush1.msra.mxu0 0.0
        %619 = vmatprep.subr.mxu0 0.0
        %620 = vmatpush1.msra.mxu0 0.0
        %621 = vmatprep.subr.mxu0 0.0
        %622 = vmatpush1.msra.mxu0 0.0
        %623 = vmatprep.subr.mxu0 0.0
        %624 = vmatpush1.msra.mxu0 0.0
        %625 = vmatprep.subr.mxu0 0.0
        %626 = vmatpush1.msra.mxu0 0.0
        %627 = vmatprep.subr.mxu0 0.0
        %628 = vmatpush1.msra.mxu0 0.0
        %629 = vmatprep.subr.mxu0 0.0
        %630 = vmatpush1.msra.mxu0 0.0
        %631 = vmatprep.subr.mxu0 0.0
        %632 = vmatpush1.msra.mxu0 0.0
        %633 = vmatprep.subr.mxu0 0.0
        %634 = vmatpush1.msra.mxu0 0.0
        %635 = vmatprep.subr.mxu0 0.0
        %636 = vmatpush1.msra.mxu0 0.0
        %637 = vmatprep.subr.mxu0 0.0
        %638 = vmatpush1.msra.mxu0 %v480
        %639 = vmatprep.subr.mxu0 0.0
        %640 = vmatpush1.msra.mxu0 %v479
        %641 = vmatprep.subr.mxu0 0.0
        %642 = vmatpush1.msra.mxu0 %v478
        %643 = vmatprep.subr.mxu0 0.0
        %644 = vmatpush1.msra.mxu0 %v477
        %645 = vmatprep.subr.mxu0 0.0
        %646 = vmatpush2.msra.mxu0 0.0
        %647 = vmatprep.subr.mxu0 0.0
        %648 = vmatpush2.msra.mxu0 0.0
        %649 = vmatprep.subr.mxu0 0.0
        %650 = vmatpush2.msra.mxu0 0.0
        %651 = vmatprep.subr.mxu0 0.0
        %652 = vmatpush2.msra.mxu0 0.0
        %653 = vmatprep.subr.mxu0 0.0
        %654 = vmatpush2.msra.mxu0 0.0
        %655 = vmatprep.subr.mxu0 0.0
        %656 = vmatpush2.msra.mxu0 0.0
        %657 = vmatprep.subr.mxu0 0.0
        %658 = vmatpush2.msra.mxu0 0.0
        %659 = vmatprep.subr.mxu0 0.0
        %660 = vmatpush2.msra.mxu0 0.0
        %661 = vmatprep.subr.mxu0 0.0
        %662 = vmatpush2.msra.mxu0 0.0
        %663 = vmatprep.subr.mxu0 0.0
        %664 = vmatpush2.msra.mxu0 0.0
        %665 = vmatprep.subr.mxu0 0.0
        %666 = vmatpush2.msra.mxu0 0.0
        %667 = vmatprep.subr.mxu0 0.0
        %668 = vmatpush2.msra.mxu0 0.0
        %669 = vmatprep.subr.mxu0 0.0
        %670 = vmatpush2.msra.mxu0 0.0
        %671 = vmatprep.subr.mxu0 0.0
        %672 = vmatpush2.msra.mxu0 0.0
        %673 = vmatprep.subr.mxu0 0.0
        %674 = vmatpush2.msra.mxu0 0.0
        %675 = vmatprep.subr.mxu0 0.0
        %676 = vmatpush2.msra.mxu0 0.0
        %677 = vmatprep.mubr.f32.mxu0 0.0
        %678 = vmatmul.mubr.f32.gmra.mxu0 %v611
        %v679 = vpop.f32.mrf.mxu0
        %v680 = vadd.f32 0.0, %v679
        %v681 = vpop.f32.mrf.mxu0
        %682 = vdwg.mxu0
        %v683 = vadd.f32 %v607, %v680
        %v684 = vxor.u32 %v683, 2147483648
        %v685 = vmul.f32 %v684, 1.442695
        %v686 = vpow.pop %v685
        %v687 = vadd.f32 %v686, 1.0
        %v688 = vrcp.pop %v687
        %v689 = vmul.f32 1.0, %v688
        %v690 = vtanh.pop %v683
        %692 = vrot.lane.b32.xlu0 %v609, 32
        %v693 = vpop.permute.xlu0 %692
        %v695 = vmul.f32 %v689, %v693
        %697 = vrot.lane.b32.xlu0 %v690, 64
        %v698 = vpop.permute.xlu0 %697
        %v700 = vmul.f32 %v689, %v698
        %702 = vrot.lane.b32.xlu0 %v700, 32
        %v703 = vpop.permute.xlu0 %702
        %v705 = vadd.f32 %v695, %v703
        %v706 = vtanh.pop %v705
        %708 = vrot.lane.b32.xlu0 %v706, 64
        %v709 = vpop.permute.xlu0 %708
        %v711 = vmul.f32 %v689, %v709
        %713 = vrot.lane.b32.xlu0 %v705, 96
        %v714 = vpop.permute.xlu0 %713
        %716 = vst.msk [vmem:[#allocation3] sm:$0x3] %vm595, %v714
        %718 = vrot.lane.b32.xlu0 %v711, 32
        %v719 = vpop.permute.xlu0 %718
        %721 = vst.msk [vmem:[#allocation2] sm:$0x3] %vm595, %v719
        %s722 = scalar_lea.vmem %s365, %s605 [#allocation11]
        %723 = vst.msk [vmem:[%s722] sm:$0x3] %vm595, %v719
        %s724 = scalar_select %p481, 2, 1
        %s725 = smul.u32 %s724, 2
        %s726 = scalar_lea.vmem [#allocation4], %s725
        %v727 = vld [vmem:[%s726] sm:$0x3]
        %v728 = vld [vmem:[#allocation2] sm:$0x3]
        %v729 = vld [vmem:[#allocation3] sm:$0x3]
        %v731 = vsel %vm488, %v728, 0
        %733 = vmatprep.subr.mxu0 0.0
        %734 = vmatpush1.msra.mxu0 0.0
        %735 = vmatprep.subr.mxu0 0.0
        %736 = vmatpush1.msra.mxu0 0.0
        %737 = vmatprep.subr.mxu0 0.0
        %738 = vmatpush1.msra.mxu0 0.0
        %739 = vmatprep.subr.mxu0 0.0
        %740 = vmatpush1.msra.mxu0 0.0
        %741 = vmatprep.subr.mxu0 0.0
        %742 = vmatpush1.msra.mxu0 0.0
        %743 = vmatprep.subr.mxu0 0.0
        %744 = vmatpush1.msra.mxu0 0.0
        %745 = vmatprep.subr.mxu0 0.0
        %746 = vmatpush1.msra.mxu0 0.0
        %747 = vmatprep.subr.mxu0 0.0
        %748 = vmatpush1.msra.mxu0 0.0
        %749 = vmatprep.subr.mxu0 0.0
        %750 = vmatpush1.msra.mxu0 0.0
        %751 = vmatprep.subr.mxu0 0.0
        %752 = vmatpush1.msra.mxu0 0.0
        %753 = vmatprep.subr.mxu0 0.0
        %754 = vmatpush1.msra.mxu0 0.0
        %755 = vmatprep.subr.mxu0 0.0
        %756 = vmatpush1.msra.mxu0 0.0
        %757 = vmatprep.subr.mxu0 0.0
        %758 = vmatpush1.msra.mxu0 %v480
        %759 = vmatprep.subr.mxu0 0.0
        %760 = vmatpush1.msra.mxu0 %v479
        %761 = vmatprep.subr.mxu0 0.0
        %762 = vmatpush1.msra.mxu0 %v478
        %763 = vmatprep.subr.mxu0 0.0
        %764 = vmatpush1.msra.mxu0 %v477
        %765 = vmatprep.subr.mxu0 0.0
        %766 = vmatpush2.msra.mxu0 0.0
        %767 = vmatprep.subr.mxu0 0.0
        %768 = vmatpush2.msra.mxu0 0.0
        %769 = vmatprep.subr.mxu0 0.0
        %770 = vmatpush2.msra.mxu0 0.0
        %771 = vmatprep.subr.mxu0 0.0
        %772 = vmatpush2.msra.mxu0 0.0
        %773 = vmatprep.subr.mxu0 0.0
        %774 = vmatpush2.msra.mxu0 0.0
        %775 = vmatprep.subr.mxu0 0.0
        %776 = vmatpush2.msra.mxu0 0.0
        %777 = vmatprep.subr.mxu0 0.0
        %778 = vmatpush2.msra.mxu0 0.0
        %779 = vmatprep.subr.mxu0 0.0
        %780 = vmatpush2.msra.mxu0 0.0
        %781 = vmatprep.subr.mxu0 0.0
        %782 = vmatpush2.msra.mxu0 0.0
        %783 = vmatprep.subr.mxu0 0.0
        %784 = vmatpush2.msra.mxu0 0.0
        %785 = vmatprep.subr.mxu0 0.0
        %786 = vmatpush2.msra.mxu0 0.0
        %787 = vmatprep.subr.mxu0 0.0
        %788 = vmatpush2.msra.mxu0 0.0
        %789 = vmatprep.subr.mxu0 0.0
        %790 = vmatpush2.msra.mxu0 0.0
        %791 = vmatprep.subr.mxu0 0.0
        %792 = vmatpush2.msra.mxu0 0.0
        %793 = vmatprep.subr.mxu0 0.0
        %794 = vmatpush2.msra.mxu0 0.0
        %795 = vmatprep.subr.mxu0 0.0
        %796 = vmatpush2.msra.mxu0 0.0
        %797 = vmatprep.mubr.f32.mxu0 0.0
        %798 = vmatmul.mubr.f32.gmra.mxu0 %v731
        %v799 = vpop.f32.mrf.mxu0
        %v800 = vadd.f32 0.0, %v799
        %v801 = vpop.f32.mrf.mxu0
        %802 = vdwg.mxu0
        %v803 = vadd.f32 %v727, %v800
        %v804 = vxor.u32 %v803, 2147483648
        %v805 = vmul.f32 %v804, 1.442695
        %v806 = vpow.pop %v805
        %v807 = vadd.f32 %v806, 1.0
        %v808 = vrcp.pop %v807
        %v809 = vmul.f32 1.0, %v808
        %v810 = vtanh.pop %v803
        %812 = vrot.lane.b32.xlu0 %v729, 32
        %v813 = vpop.permute.xlu0 %812
        %v815 = vmul.f32 %v809, %v813
        %817 = vrot.lane.b32.xlu0 %v810, 64
        %v818 = vpop.permute.xlu0 %817
        %v820 = vmul.f32 %v809, %v818
        %822 = vrot.lane.b32.xlu0 %v820, 32
        %v823 = vpop.permute.xlu0 %822
        %v825 = vadd.f32 %v815, %v823
        %v826 = vtanh.pop %v825
        %828 = vrot.lane.b32.xlu0 %v826, 64
        %v829 = vpop.permute.xlu0 %828
        %v831 = vmul.f32 %v809, %v829
        %833 = vrot.lane.b32.xlu0 %v825, 96
        %v834 = vpop.permute.xlu0 %833
        %836 = vst.msk [vmem:[#allocation3] sm:$0x3] %vm595, %v834
        %838 = vrot.lane.b32.xlu0 %v831, 32
        %v839 = vpop.permute.xlu0 %838
        %841 = vst.msk [vmem:[#allocation2] sm:$0x3] %vm595, %v839
        %s842 = scalar_lea.vmem %s365, %s725 [#allocation11]
        %843 = vst.msk [vmem:[%s842] sm:$0x3] %vm595, %v839
        %s844 = scalar_select %p481, 3, 0
        %s845 = smul.u32 %s844, 2
        %s846 = scalar_lea.vmem [#allocation4], %s845
        %v847 = vld [vmem:[%s846] sm:$0x3]
        %v848 = vld [vmem:[#allocation2] sm:$0x3]
        %v849 = vld [vmem:[#allocation3] sm:$0x3]
        %v851 = vsel %vm488, %v848, 0
        %853 = vmatprep.subr.mxu0 0.0
        %854 = vmatpush1.msra.mxu0 0.0
        %855 = vmatprep.subr.mxu0 0.0
        %856 = vmatpush1.msra.mxu0 0.0
        %857 = vmatprep.subr.mxu0 0.0
        %858 = vmatpush1.msra.mxu0 0.0
        %859 = vmatprep.subr.mxu0 0.0
        %860 = vmatpush1.msra.mxu0 0.0
        %861 = vmatprep.subr.mxu0 0.0
        %862 = vmatpush1.msra.mxu0 0.0
        %863 = vmatprep.subr.mxu0 0.0
        %864 = vmatpush1.msra.mxu0 0.0
        %865 = vmatprep.subr.mxu0 0.0
        %866 = vmatpush1.msra.mxu0 0.0
        %867 = vmatprep.subr.mxu0 0.0
        %868 = vmatpush1.msra.mxu0 0.0
        %869 = vmatprep.subr.mxu0 0.0
        %870 = vmatpush1.msra.mxu0 0.0
        %871 = vmatprep.subr.mxu0 0.0
        %872 = vmatpush1.msra.mxu0 0.0
        %873 = vmatprep.subr.mxu0 0.0
        %874 = vmatpush1.msra.mxu0 0.0
        %875 = vmatprep.subr.mxu0 0.0
        %876 = vmatpush1.msra.mxu0 0.0
        %877 = vmatprep.subr.mxu0 0.0
        %878 = vmatpush1.msra.mxu0 %v480
        %879 = vmatprep.subr.mxu0 0.0
        %880 = vmatpush1.msra.mxu0 %v479
        %881 = vmatprep.subr.mxu0 0.0
        %882 = vmatpush1.msra.mxu0 %v478
        %883 = vmatprep.subr.mxu0 0.0
        %884 = vmatpush1.msra.mxu0 %v477
        %885 = vmatprep.subr.mxu0 0.0
        %886 = vmatpush2.msra.mxu0 0.0
        %887 = vmatprep.subr.mxu0 0.0
        %888 = vmatpush2.msra.mxu0 0.0
        %889 = vmatprep.subr.mxu0 0.0
        %890 = vmatpush2.msra.mxu0 0.0
        %891 = vmatprep.subr.mxu0 0.0
        %892 = vmatpush2.msra.mxu0 0.0
        %893 = vmatprep.subr.mxu0 0.0
        %894 = vmatpush2.msra.mxu0 0.0
        %895 = vmatprep.subr.mxu0 0.0
        %896 = vmatpush2.msra.mxu0 0.0
        %897 = vmatprep.subr.mxu0 0.0
        %898 = vmatpush2.msra.mxu0 0.0
        %899 = vmatprep.subr.mxu0 0.0
        %900 = vmatpush2.msra.mxu0 0.0
        %901 = vmatprep.subr.mxu0 0.0
        %902 = vmatpush2.msra.mxu0 0.0
        %903 = vmatprep.subr.mxu0 0.0
        %904 = vmatpush2.msra.mxu0 0.0
        %905 = vmatprep.subr.mxu0 0.0
        %906 = vmatpush2.msra.mxu0 0.0
        %907 = vmatprep.subr.mxu0 0.0
        %908 = vmatpush2.msra.mxu0 0.0
        %909 = vmatprep.subr.mxu0 0.0
        %910 = vmatpush2.msra.mxu0 0.0
        %911 = vmatprep.subr.mxu0 0.0
        %912 = vmatpush2.msra.mxu0 0.0
        %913 = vmatprep.subr.mxu0 0.0
        %914 = vmatpush2.msra.mxu0 0.0
        %915 = vmatprep.subr.mxu0 0.0
        %916 = vmatpush2.msra.mxu0 0.0
        %917 = vmatprep.mubr.f32.mxu0 0.0
        %918 = vmatmul.mubr.f32.gmra.mxu0 %v851
        %v919 = vpop.f32.mrf.mxu0
        %v920 = vadd.f32 0.0, %v919
        %v921 = vpop.f32.mrf.mxu0
        %922 = vdwg.mxu0
        %v923 = vadd.f32 %v847, %v920
        %v924 = vxor.u32 %v923, 2147483648
        %v925 = vmul.f32 %v924, 1.442695
        %v926 = vpow.pop %v925
        %v927 = vadd.f32 %v926, 1.0
        %v928 = vrcp.pop %v927
        %v929 = vmul.f32 1.0, %v928
        %v930 = vtanh.pop %v923
        %932 = vrot.lane.b32.xlu0 %v849, 32
        %v933 = vpop.permute.xlu0 %932
        %v935 = vmul.f32 %v929, %v933
        %937 = vrot.lane.b32.xlu0 %v930, 64
        %v938 = vpop.permute.xlu0 %937
        %v940 = vmul.f32 %v929, %v938
        %942 = vrot.lane.b32.xlu0 %v940, 32
        %v943 = vpop.permute.xlu0 %942
        %v945 = vadd.f32 %v935, %v943
        %v946 = vtanh.pop %v945
        %948 = vrot.lane.b32.xlu0 %v946, 64
        %v949 = vpop.permute.xlu0 %948
        %v951 = vmul.f32 %v929, %v949
        %953 = vrot.lane.b32.xlu0 %v945, 96
        %v954 = vpop.permute.xlu0 %953
        %956 = vst.msk [vmem:[#allocation3] sm:$0x3] %vm595, %v954
        %958 = vrot.lane.b32.xlu0 %v951, 32
        %v959 = vpop.permute.xlu0 %958
        %961 = vst.msk [vmem:[#allocation2] sm:$0x3] %vm595, %v959
        %s962 = scalar_lea.vmem %s365, %s845 [#allocation11]
        %963 = vst.msk [vmem:[%s962] sm:$0x3] %vm595, %v959
        %p964 = scmp.eq.s32.totalorder %s34, 1
        // Predicated region
        $region53: #{tpu_custom_call.1} parent=35 // pred_check
          %p965 = pneg %p964
        $region54: #{tpu_custom_call.1} parent=35 // pred_check_branch
          %967 = sbr.rel (%p965) target = $region56
        $region55: #{tpu_custom_call.1} parent=35 // pred_region
          %v968 = vld [vmem:[#allocation2] sm:$0x3]
          %969 = vst.msk [vmem:[%s372] sm:$0x3] %vm595, %v968
        $region56: #{tpu_custom_call.1} parent=35 // pred_fallthru
          _
        %s970 = sand.u32 %s171, 1
        %s971 = scalar_lea.sflag [#allocation7], %s970
        %s972 = sand.u32 %s171, 1
        %s973 = smul.addr %s972, 8
        %s974 = scalar_lea.vmem [#allocation11], %s973
        %s975 = sand.u32 %s197, 1
        %s976 = scalar_lea.sflag [#allocation13], %s975
        %s977 = sand.u32 %s197, 1
        %s978 = smul.addr %s977, 2
        %s979 = scalar_lea.vmem [#allocation12], %s978
        // Predicated region
        $region57: #{tpu_custom_call.1} parent=35 // pred_check
          %p980 = pneg %p181
        $region58: #{tpu_custom_call.1} parent=35 // pred_check_branch
          %982 = sbr.rel (%p980) target = $region60
        $region59: #{tpu_custom_call.1} parent=35 // pred_region
          %s983 = smul.u32 %s34, 2
          %s984 = ssub.s32 1, %s983
          %s985 = smul.u32 %s33, %s984
          %s986 = sadd.s32 %s34, %s985
          %s987 = smul.u32 4, %s986
          %s989 = ssub.s32 128, 128
          %990 = vsyncadd %s971, %s989
          %s991 = smul.addr %s33, 8
          %s992 = sadd.s32 %s987, %s991
          %s993 = smul.addr %s992, 32
          %s994 = scalar_lea.hbm %s4, %s993
          %s995 = sshll.u32 %s974, 4
          %s996 = int_to_ptr.vmem [resolvable:$true] %s995
          %1001 = dma.vmem_to_hbm [thread:$0]  %s996, 128, %s994, %s971, 32, 32, 2
        $region60: #{tpu_custom_call.1} parent=35 // pred_fallthru
          _
        // Predicated region
        $region61: #{tpu_custom_call.1} parent=35 // pred_check
          %p1002 = pneg %p207
        $region62: #{tpu_custom_call.1} parent=35 // pred_check_branch
          %1004 = sbr.rel (%p1002) target = $region64
        $region63: #{tpu_custom_call.1} parent=35 // pred_region
          %s1006 = ssub.s32 32, 32
          %1007 = vsyncadd %s976, %s1006
          %s1008 = smul.addr %s33, 32
          %s1009 = scalar_lea.hbm %s5, %s1008
          %s1011 = sshll.u32 %s979, 4
          %s1012 = int_to_ptr.vmem [resolvable:$true] %s1011
          %1014 = dma.vmem_to_hbm [thread:$0]  %s1012, 32, %s1009, %s976
        $region64: #{tpu_custom_call.1} parent=35 // pred_fallthru
          _
      $region36: #{tpu_custom_call.1} parent=5 // pred_fallthru
        _
      %p1015 = scmp.le.s32.totalorder 2, %s24
      // Predicated region
      $region65: #{tpu_custom_call.1} parent=5 // pred_check
        %p1016 = pneg %p1015
      $region66: #{tpu_custom_call.1} parent=5 // pred_check_branch
        %1018 = sbr.rel (%p1016) target = $region68
      $region67: #{tpu_custom_call.1} parent=5 // pred_region
        %s1019 = ssub.s32 %s24, 2
        // Predicated region
        $region69: #{tpu_custom_call.1} parent=67 // pred_check
          %p1020 = pneg %p187
        $region70: #{tpu_custom_call.1} parent=67 // pred_check_branch
          %1022 = sbr.rel (%p1020) target = $region72
        $region71: #{tpu_custom_call.1} parent=67 // pred_region
          %s1023 = sand.u32 %s172, 1
          %s1024 = scalar_lea.sflag [#allocation7], %s1023
          %s1025 = sand.u32 %s172, 1
          %s1026 = smul.addr %s1025, 8
          %s1027 = scalar_lea.vmem [#allocation11], %s1026
          %1028 = dma.done %s1024, 128
        $region72: #{tpu_custom_call.1} parent=67 // pred_fallthru
          _
        // Predicated region
        $region73: #{tpu_custom_call.1} parent=67 // pred_check
          %p1029 = pneg %p213
        $region74: #{tpu_custom_call.1} parent=67 // pred_check_branch
          %1031 = sbr.rel (%p1029) target = $region76
        $region75: #{tpu_custom_call.1} parent=67 // pred_region
          %s1032 = sand.u32 %s198, 1
          %s1033 = scalar_lea.sflag [#allocation13], %s1032
          %s1034 = sand.u32 %s198, 1
          %s1035 = smul.addr %s1034, 2
          %s1036 = scalar_lea.vmem [#allocation12], %s1035
          %1037 = dma.done %s1033, 32
        $region76: #{tpu_custom_call.1} parent=67 // pred_fallthru
          _
      $region68: #{tpu_custom_call.1} parent=5 // pred_fallthru
        _
    $region6: #{tpu_custom_call.1} parent=1 // loop_footer
      %s28 = sadd.s32 1, %s24
    $region7: #{tpu_custom_call.1} parent=1 // loop_footer_branch
      %23 = sbr.rel target = $region3
    $region8: #{tpu_custom_call.1} parent=1 // loop_exit
      _
    %1038 = vsyncpa [#allocation6], 1
    %s1039 = scalar_lea.sflag [#allocation6], 1
    %1040 = vsyncpa %s1039, 1
    %1041 = vsyncpa [#allocation9], 1
    %s1042 = scalar_lea.sflag [#allocation9], 1
    %1043 = vsyncpa %s1042, 1
    %1044 = vsyncpa [#allocation7], 1
    %s1045 = scalar_lea.sflag [#allocation7], 1
    %1046 = vsyncpa %s1045, 1
    %1047 = vsyncpa [#allocation13], 1
    %s1048 = scalar_lea.sflag [#allocation13], 1
    %1049 = vsyncpa %s1048, 1

</llo_original>
